<compile_context>
chip_gen: v6e
topology: v6e:2x2x1
jax: 0.10.0
libtpu: 0.0.40
codegen_flags: <defaults>
</compile_context>

<pallas_src>
import functools

import jax
import jax.numpy as jnp
import numpy as np
from jax.experimental import pallas as pl
from jax.experimental.pallas import tpu as pltpu


def _location_attention_kernel(
    cols_ref,    # (BT*Tp, taps*K) bf16 : im2col(attn_state)
    enc_ref,     # (BT*Tp, Denc)   f32  : encoder_out rows
    decp_ref,    # (BT, A)         f32  : decoder projection (hoisted to wrapper)
    mask_ref,    # (BT, Tp)        f32  : 1.0 == padded position
    w_enc_ref,   # (Denc, A)       f32
    w_fold_ref,  # (taps*K, A)     bf16 : conv weight folded into proj_attn
    b_enc_ref,   # (1, A)          f32
    w_out_ref,   # (1, A)          f32
    b_out_ref,   # (1, 1)          f32
    c_ref,       # (BT, Denc)      f32 out
    w_ref,       # (BT, Tp)        f32 out
    *,
    scaling: float,
    bt: int,
    seq_len: int,
):
    T = seq_len                                  # padded sequence length (multiple of 8)
    A = w_enc_ref.shape[1]
    Denc = enc_ref.shape[1]

    enc = enc_ref[...]                                             # (BT*T, Denc) f32

    # proj_enc(encoder_out) + proj_attn(conv(attn_state)) : two back-to-back GEMMs
    # (f32 encoder path for precision, bf16 folded conv path for traffic).
    proj = jnp.dot(enc, w_enc_ref[...],
                   preferred_element_type=jnp.float32)             # (BT*T, A)
    proj = proj + jnp.dot(cols_ref[...], w_fold_ref[...],
                          preferred_element_type=jnp.float32)      # (BT*T, A)
    proj3 = proj.reshape(bt, T, A)                                 # leading-dim split (free)

    # proj_out = Linear(A,1) o Tanh ; score kept lane-dense as (BT, T).
    h = jnp.tanh(proj3 + decp_ref[...][:, None, :] + b_enc_ref[...])   # (BT, T, A)
    score = jnp.sum(h * w_out_ref[...], axis=-1) + b_out_ref[...]      # (BT, T)

    # masked softmax over T (lane axis); exact normalisation.
    score = jnp.where(mask_ref[...] > 0.5, -jnp.inf, score)
    scaled = scaling * score
    m = jnp.max(scaled, axis=-1, keepdims=True)                        # (BT, 1)
    e = jnp.exp(scaled - m)
    s = jnp.sum(e, axis=-1, keepdims=True)                             # (BT, 1)
    attn_w = e / s                                                     # (BT, T)
    w_ref[...] = attn_w

    # Context: per-row weighted sum (VPU multiply + cross-sublane reduce).
    enc3 = enc.reshape(bt, T, Denc)                                    # free leading split
    c_ref[...] = jnp.sum(attn_w[:, :, None] * enc3, axis=1)            # (BT, Denc)


def location_attention(encoder_out, encoder_padding_mask, decoder_h, attn_state,
                       params, *, conv_kernel_size, scaling=2.0, batch_block=64):
    """Pallas implementation of LocationAttention.forward (cold-cache path).

    encoder_out:          (B, T, D_enc) float32
    encoder_padding_mask: (B, T) bool
    decoder_h:            (B, D_dec) float32 or None
    attn_state:           (B, K, T) float32   (K == attn_state_kernel_size)
    returns: (c, w) with c: (B, D_enc), w: (B, T)
    """
    B, T, Denc = encoder_out.shape
    K = attn_state.shape[1]
    ck = conv_kernel_size
    taps = 2 * ck + 1
    Ddec = params["w_dec"].shape[0]
    A = params["w_enc"].shape[1]
    F = taps * K

    if decoder_h is None:
        decoder_h = jnp.zeros((B, Ddec), jnp.float32)

    def _rup(x, m):
        return ((x + m - 1) // m) * m

    # ---- batch block selection (main tuning knob) ----
    bt = min(batch_block, _rup(B, 8))
    if B > 8:
        # keep >= 2 grid steps when the batch allows it (dual-TensorCore on v7x)
        bt = min(bt, _rup(-(-B // 2), 8))
    bt = max(8, _rup(bt, 8))
    Bp = _rup(B, bt)
    Tp = _rup(T, 8)      # keeps the in-kernel leading-dim reshapes tile-aligned

    # ---- wrapper-side layout / weight prep (pure data movement, off the hot path) ----
    # im2col of the conv input: cols[b, t, j*K + k] = attn_state_padded[b, k, t + j]
    ap = jnp.pad(attn_state.astype(jnp.float32), ((0, 0), (0, 0), (ck, ck)))   # (B,K,T+2ck)
    cols = jnp.stack([ap[:, :, j:j + T] for j in range(taps)], axis=-1)        # (B,K,T,taps)
    cols = jnp.transpose(cols, (0, 2, 3, 1)).reshape(B, T, F)                  # (B,T,taps*K)

    enc = encoder_out.astype(jnp.float32)
    mask = encoder_padding_mask.astype(jnp.float32)
    dec = decoder_h.astype(jnp.float32)

    pb, pt = Bp - B, Tp - T
    # time padding: masked (=1.0) -> -inf score -> zero attention weight
    # batch padding: unmasked (=0.0) -> finite garbage rows, sliced off below
    enc = jnp.pad(enc, ((0, pb), (0, pt), (0, 0)))
    cols = jnp.pad(cols, ((0, pb), (0, pt), (0, 0)))
    mask = jnp.pad(mask, ((0, 0), (0, pt)), constant_values=1.0)
    mask = jnp.pad(mask, ((0, pb), (0, 0)), constant_values=0.0)
    dec = jnp.pad(dec, ((0, pb), (0, 0)))

    # flatten to 2-D slabs with contiguous rows in HBM
    enc2 = enc.reshape(Bp * Tp, Denc)                        # f32 (full-precision context)
    cols2 = cols.astype(jnp.bfloat16).reshape(Bp * Tp, F)    # bf16 halves HBM traffic

    # hoisted decoder projection: one >=B-row XLA GEMM instead of a BT-row MXU pass/step
    dec_proj = dec @ params["w_dec"].astype(jnp.float32)     # (Bp, A) f32

    # fold the 1-D location-conv weight into proj_attn
    w_fold = jnp.einsum("jkc,ca->jka", params["w_conv"], params["w_attn"]).reshape(F, A)
    w_fold = w_fold.astype(jnp.bfloat16)
    w_enc = params["w_enc"].astype(jnp.float32)
    b_enc = params["b_enc"].reshape(1, A).astype(jnp.float32)
    w_out = params["w_out"].reshape(1, A).astype(jnp.float32)
    b_out = params["b_out"].reshape(1, 1).astype(jnp.float32)

    kernel = functools.partial(_location_attention_kernel,
                               scaling=float(scaling), bt=bt, seq_len=Tp)

    c, w = pl.pallas_call(
        kernel,
        out_shape=(
            jax.ShapeDtypeStruct((Bp, Denc), jnp.float32),
            jax.ShapeDtypeStruct((Bp, Tp), jnp.float32),
        ),
        grid_spec=pltpu.PrefetchScalarGridSpec(
            num_scalar_prefetch=0,
            grid=(Bp // bt,),
            in_specs=[
                pl.BlockSpec((bt * Tp, F), lambda b: (b, 0)),       # im2col cols (bf16)
                pl.BlockSpec((bt * Tp, Denc), lambda b: (b, 0)),    # encoder rows (f32)
                pl.BlockSpec((bt, A), lambda b: (b, 0)),            # decoder projection
                pl.BlockSpec((bt, Tp), lambda b: (b, 0)),           # padding mask
                pl.BlockSpec((Denc, A), lambda b: (0, 0)),          # w_enc (resident)
                pl.BlockSpec((F, A), lambda b: (0, 0)),             # folded conv weight
                pl.BlockSpec((1, A), lambda b: (0, 0)),             # b_enc
                pl.BlockSpec((1, A), lambda b: (0, 0)),             # w_out (row)
                pl.BlockSpec((1, 1), lambda b: (0, 0)),             # b_out
            ],
            out_specs=[
                pl.BlockSpec((bt, Denc), lambda b: (b, 0)),         # context c
                pl.BlockSpec((bt, Tp), lambda b: (b, 0)),           # attention weights w
            ],
        ),
        compiler_params=pltpu.CompilerParams(
            dimension_semantics=("parallel",),
            vmem_limit_bytes=32 * 1024 * 1024),
    )(cols2, enc2, dec_proj, mask, w_enc, w_fold, b_enc, w_out, b_out)

    return c[:B], w[:B, :T]


def _reference(encoder_out, encoder_padding_mask, decoder_h, attn_state, params,
               *, conv_kernel_size, scaling=2.0):
    """Pure-JAX f32 reference mirroring the PyTorch forward."""
    ck = conv_kernel_size
    B, T, _ = encoder_out.shape
    pe = encoder_out @ params["w_enc"] + params["b_enc"]                 # (B,T,A)
    attn_pad = jnp.pad(attn_state, ((0, 0), (0, 0), (ck, ck)))           # (B,K,T+2ck)
    conv = jnp.zeros((B, T, params["w_conv"].shape[2]), jnp.float32)
    for j in range(2 * ck + 1):
        conv = conv + jnp.einsum("bkt,kc->btc", attn_pad[:, :, j:j + T],
                                 params["w_conv"][j])
    attn = conv @ params["w_attn"]                                       # (B,T,A)
    dec = (decoder_h @ params["w_dec"])[:, None, :]                      # (B,1,A)
    out = (jnp.tanh(attn + pe + dec) @ params["w_out"] + params["b_out"])[..., 0]
    out = jnp.where(encoder_padding_mask, -jnp.inf, out)
    w = jax.nn.softmax(scaling * out, axis=1)
    c = jnp.sum(encoder_out * w[..., None], axis=1)
    return c, w


if __name__ == "__main__":
    # Small deterministic configuration chosen to exercise both the batch-padding
    # and time-padding paths and to give >=2 grid steps for both batch blocks.
    B, T = 40, 12
    D_enc, D_dec, A = 32, 24, 16
    K = 2                # attn_state_kernel_size (conv in-channels)
    C = 8                # conv_dim
    ck = 3               # conv_kernel_size  -> taps = 7
    scaling = 2.0

    key = jax.random.PRNGKey(0)
    ks = jax.random.split(key, 10)

    encoder_out = jax.random.normal(ks[0], (B, T, D_enc), jnp.float32)
    decoder_h = jax.random.normal(ks[1], (B, D_dec), jnp.float32)
    attn_state = jax.random.uniform(ks[2], (B, K, T), jnp.float32)
    encoder_padding_mask = jnp.zeros((B, T), bool)
    encoder_padding_mask = encoder_padding_mask.at[1, 9:].set(True)
    encoder_padding_mask = encoder_padding_mask.at[7, 5:].set(True)
    encoder_padding_mask = encoder_padding_mask.at[23, 10:].set(True)

    # Deterministic synthetic parameters (math layout: x @ W).
    params = {
        "w_enc": 0.1 * jax.random.normal(ks[3], (D_enc, A), jnp.float32),
        "b_enc": 0.1 * jax.random.normal(ks[4], (1, A), jnp.float32),
        "w_dec": 0.1 * jax.random.normal(ks[5], (D_dec, A), jnp.float32),
        "w_attn": 0.1 * jax.random.normal(ks[6], (C, A), jnp.float32),
        # stored as (taps, K, C); w_conv[j, k, c] == torch_conv_weight[c, k, j]
        "w_conv": 0.1 * jax.random.normal(ks[7], (2 * ck + 1, K, C), jnp.float32),
        "w_out": 0.1 * jax.random.normal(ks[8], (A, 1), jnp.float32),
        "b_out": 0.1 * jax.random.normal(ks[9], (1, 1), jnp.float32),
    }

    c_ref, w_ref = _reference(encoder_out, encoder_padding_mask, decoder_h,
                              attn_state, params, conv_kernel_size=ck,
                              scaling=scaling)

    for bb in (16, 64):   # small block (3 grid steps) and default block (2 grid steps)
        c, w = location_attention(encoder_out, encoder_padding_mask, decoder_h,
                                  attn_state, params, conv_kernel_size=ck,
                                  scaling=scaling, batch_block=bb)
        jax.block_until_ready((c, w))

        assert c.shape == (B, D_enc) and w.shape == (B, T)
        np.testing.assert_allclose(np.asarray(w), np.asarray(w_ref), rtol=1e-2, atol=1e-2)
        np.testing.assert_allclose(np.asarray(c), np.asarray(c_ref), rtol=1e-2, atol=1e-2)
        # attention weights over unmasked positions sum to 1 (exact divide in-kernel)
        np.testing.assert_allclose(np.asarray(w).sum(axis=1), np.ones(B), rtol=0, atol=1e-5)

    print("KERNEL_OK")
</pallas_src>

<mosaic_0001>
module attributes {stable_mosaic.version = 11 : i64} {
  func.func @_location_attention_kernel(%arg0: i32, %arg1: memref<256x14xbf16, #tpu.memory_space<vmem>>, %arg2: memref<256x32xf32, #tpu.memory_space<vmem>>, %arg3: memref<16x16xf32, #tpu.memory_space<vmem>>, %arg4: memref<16x16xf32, #tpu.memory_space<vmem>>, %arg5: memref<32x16xf32, #tpu.memory_space<vmem>>, %arg6: memref<14x16xbf16, #tpu.memory_space<vmem>>, %arg7: memref<1x16xf32, #tpu.memory_space<vmem>>, %arg8: memref<1x16xf32, #tpu.memory_space<vmem>>, %arg9: memref<1x1xf32, #tpu.memory_space<vmem>>, %arg10: memref<16x32xf32, #tpu.memory_space<vmem>>, %arg11: memref<16x16xf32, #tpu.memory_space<vmem>>) attributes {dimension_semantics = [#tpu.dimension_semantics<parallel>], iteration_bounds = array<i64: 3>, scalar_prefetch = 0 : i64, scratch_operands = 0 : i64, tpu.core_type = #tpu.core_type<tc>, window_params = [{transform_indices = @transform_0, window_bounds = array<i64: 256, 14>}, {transform_indices = @transform_1, window_bounds = array<i64: 256, 32>}, {transform_indices = @transform_2, window_bounds = array<i64: 16, 16>}, {transform_indices = @transform_3, window_bounds = array<i64: 16, 16>}, {pipeline_mode = #tpu.pipeline_mode<synchronous>, transform_indices = @transform_4, window_bounds = array<i64: 32, 16>}, {pipeline_mode = #tpu.pipeline_mode<synchronous>, transform_indices = @transform_5, window_bounds = array<i64: 14, 16>}, {pipeline_mode = #tpu.pipeline_mode<synchronous>, transform_indices = @transform_6, window_bounds = array<i64: 1, 16>}, {pipeline_mode = #tpu.pipeline_mode<synchronous>, transform_indices = @transform_7, window_bounds = array<i64: 1, 16>}, {pipeline_mode = #tpu.pipeline_mode<synchronous>, transform_indices = @transform_8, window_bounds = array<i64: 1, 1>}, {transform_indices = @transform_9, window_bounds = array<i64: 16, 32>}, {transform_indices = @transform_10, window_bounds = array<i64: 16, 16>}]} {
    %c0 = arith.constant 0 : index
    %c0_0 = arith.constant 0 : index
    %0 = vector.load %arg2[%c0, %c0_0] : memref<256x32xf32, #tpu.memory_space<vmem>>, vector<256x32xf32>
    %c0_1 = arith.constant 0 : index
    %c0_2 = arith.constant 0 : index
    %1 = vector.load %arg5[%c0_1, %c0_2] : memref<32x16xf32, #tpu.memory_space<vmem>>, vector<32x16xf32>
    %cst = arith.constant dense<0.000000e+00> : vector<256x16xf32>
    %2 = tpu.matmul %0, %1, %cst {dimension_numbers = #tpu.dot_dimension_numbers<[1], [0], [0], [1], [0, 0, 1, 1], [], []>} : vector<256x32xf32>, vector<32x16xf32>, vector<256x16xf32> -> vector<256x16xf32>
    %c0_3 = arith.constant 0 : index
    %c0_4 = arith.constant 0 : index
    %3 = vector.load %arg1[%c0_3, %c0_4] : memref<256x14xbf16, #tpu.memory_space<vmem>>, vector<256x14xbf16>
    %c0_5 = arith.constant 0 : index
    %c0_6 = arith.constant 0 : index
    %4 = vector.load %arg6[%c0_5, %c0_6] : memref<14x16xbf16, #tpu.memory_space<vmem>>, vector<14x16xbf16>
    %cst_7 = arith.constant dense<0.000000e+00> : vector<256x16xf32>
    %5 = tpu.matmul %3, %4, %cst_7 {dimension_numbers = #tpu.dot_dimension_numbers<[1], [0], [0], [1], [0, 0, 1, 1], [], []>} : vector<256x14xbf16>, vector<14x16xbf16>, vector<256x16xf32> -> vector<256x16xf32>
    %6 = arith.addf %2, %5 : vector<256x16xf32>
    %7 = vector.shape_cast %6 : vector<256x16xf32> to vector<16x16x16xf32>
    %c0_8 = arith.constant 0 : index
    %c0_9 = arith.constant 0 : index
    %8 = vector.load %arg3[%c0_8, %c0_9] : memref<16x16xf32, #tpu.memory_space<vmem>>, vector<16x16xf32>
    %9 = vector.shape_cast %8 : vector<16x16xf32> to vector<16x1x16xf32>
    %10 = vector.broadcast %9 : vector<16x1x16xf32> to vector<16x16x16xf32>
    %11 = arith.addf %7, %10 : vector<16x16x16xf32>
    %c0_10 = arith.constant 0 : index
    %c0_11 = arith.constant 0 : index
    %12 = vector.load %arg7[%c0_10, %c0_11] : memref<1x16xf32, #tpu.memory_space<vmem>>, vector<1x16xf32>
    %13 = vector.shape_cast %12 : vector<1x16xf32> to vector<1x1x16xf32>
    %14 = vector.broadcast %13 : vector<1x1x16xf32> to vector<16x16x16xf32>
    %15 = arith.addf %11, %14 : vector<16x16x16xf32>
    %16 = math.tanh %15 : vector<16x16x16xf32>
    %c0_12 = arith.constant 0 : index
    %c0_13 = arith.constant 0 : index
    %17 = vector.load %arg8[%c0_12, %c0_13] : memref<1x16xf32, #tpu.memory_space<vmem>>, vector<1x16xf32>
    %18 = vector.shape_cast %17 : vector<1x16xf32> to vector<1x1x16xf32>
    %19 = vector.broadcast %18 : vector<1x1x16xf32> to vector<16x16x16xf32>
    %20 = arith.mulf %16, %19 : vector<16x16x16xf32>
    %cst_14 = arith.constant dense<0.000000e+00> : vector<16x16xf32>
    %21 = vector.multi_reduction <add>, %20, %cst_14 [2] : vector<16x16x16xf32> to vector<16x16xf32>
    %c0_15 = arith.constant 0 : index
    %c0_16 = arith.constant 0 : index
    %22 = vector.load %arg9[%c0_15, %c0_16] : memref<1x1xf32, #tpu.memory_space<vmem>>, vector<1x1xf32>
    %23 = vector.broadcast %22 : vector<1x1xf32> to vector<16x16xf32>
    %24 = arith.addf %21, %23 : vector<16x16xf32>
    %c0_17 = arith.constant 0 : index
    %c0_18 = arith.constant 0 : index
    %25 = vector.load %arg4[%c0_17, %c0_18] : memref<16x16xf32, #tpu.memory_space<vmem>>, vector<16x16xf32>
    %cst_19 = arith.constant 5.000000e-01 : f32
    %26 = vector.broadcast %cst_19 : f32 to vector<16x16xf32>
    %27 = arith.cmpf ogt, %25, %26 : vector<16x16xf32>
    %cst_20 = arith.constant 0xFF800000 : f32
    %28 = vector.broadcast %cst_20 : f32 to vector<16x16xf32>
    %29 = arith.select %27, %28, %24 : vector<16x16xi1>, vector<16x16xf32>
    %cst_21 = arith.constant 2.000000e+00 : f32
    %30 = vector.broadcast %cst_21 : f32 to vector<16x16xf32>
    %31 = arith.mulf %30, %29 : vector<16x16xf32>
    %cst_22 = arith.constant dense<0xFF800000> : vector<16xf32>
    %32 = vector.multi_reduction <maximumf>, %31, %cst_22 [1] : vector<16x16xf32> to vector<16xf32>
    %33 = vector.shape_cast %32 : vector<16xf32> to vector<16x1xf32>
    %34 = vector.broadcast %33 : vector<16x1xf32> to vector<16x16xf32>
    %35 = arith.subf %31, %34 : vector<16x16xf32>
    %36 = math.exp %35 : vector<16x16xf32>
    %cst_23 = arith.constant dense<0.000000e+00> : vector<16xf32>
    %37 = vector.multi_reduction <add>, %36, %cst_23 [1] : vector<16x16xf32> to vector<16xf32>
    %38 = vector.shape_cast %37 : vector<16xf32> to vector<16x1xf32>
    %39 = vector.broadcast %38 : vector<16x1xf32> to vector<16x16xf32>
    %40 = arith.divf %36, %39 : vector<16x16xf32>
    %c0_24 = arith.constant 0 : index
    %c0_25 = arith.constant 0 : index
    %41 = vector.load %arg11[%c0_24, %c0_25] : memref<16x16xf32, #tpu.memory_space<vmem>>, vector<16x16xf32>
    tpu.vector_store %arg11[%c0_24, %c0_25], %40 {strides = array<i32>} : memref<16x16xf32, #tpu.memory_space<vmem>>, vector<16x16xf32>,
    %42 = vector.shape_cast %0 : vector<256x32xf32> to vector<16x16x32xf32>
    %43 = vector.shape_cast %40 : vector<16x16xf32> to vector<16x16x1xf32>
    %44 = vector.broadcast %43 : vector<16x16x1xf32> to vector<16x16x32xf32>
    %45 = arith.mulf %44, %42 : vector<16x16x32xf32>
    %cst_26 = arith.constant dense<0.000000e+00> : vector<16x32xf32>
    %46 = vector.multi_reduction <add>, %45, %cst_26 [1] : vector<16x16x32xf32> to vector<16x32xf32>
    %c0_27 = arith.constant 0 : index
    %c0_28 = arith.constant 0 : index
    %47 = vector.load %arg10[%c0_27, %c0_28] : memref<16x32xf32, #tpu.memory_space<vmem>>, vector<16x32xf32>
    tpu.vector_store %arg10[%c0_27, %c0_28], %46 {strides = array<i32>} : memref<16x32xf32, #tpu.memory_space<vmem>>, vector<16x32xf32>,
    return
  }
  func.func @transform_0(%arg0: i32) -> (i32, i32) {
    %c0_i32 = arith.constant 0 : i32
    %c0_i32_0 = arith.constant 0 : i32
    return %arg0, %c0_i32 : i32, i32
  }
  func.func @transform_1(%arg0: i32) -> (i32, i32) {
    %c0_i32 = arith.constant 0 : i32
    %c0_i32_0 = arith.constant 0 : i32
    return %arg0, %c0_i32 : i32, i32
  }
  func.func @transform_2(%arg0: i32) -> (i32, i32) {
    %c0_i32 = arith.constant 0 : i32
    %c0_i32_0 = arith.constant 0 : i32
    return %arg0, %c0_i32 : i32, i32
  }
  func.func @transform_3(%arg0: i32) -> (i32, i32) {
    %c0_i32 = arith.constant 0 : i32
    %c0_i32_0 = arith.constant 0 : i32
    return %arg0, %c0_i32 : i32, i32
  }
  func.func @transform_4(%arg0: i32) -> (i32, i32) {
    %c0_i32 = arith.constant 0 : i32
    %c0_i32_0 = arith.constant 0 : i32
    %c0_i32_1 = arith.constant 0 : i32
    return %c0_i32, %c0_i32_0 : i32, i32
  }
  func.func @transform_5(%arg0: i32) -> (i32, i32) {
    %c0_i32 = arith.constant 0 : i32
    %c0_i32_0 = arith.constant 0 : i32
    %c0_i32_1 = arith.constant 0 : i32
    return %c0_i32, %c0_i32_0 : i32, i32
  }
  func.func @transform_6(%arg0: i32) -> (i32, i32) {
    %c0_i32 = arith.constant 0 : i32
    %c0_i32_0 = arith.constant 0 : i32
    %c0_i32_1 = arith.constant 0 : i32
    return %c0_i32, %c0_i32_0 : i32, i32
  }
  func.func @transform_7(%arg0: i32) -> (i32, i32) {
    %c0_i32 = arith.constant 0 : i32
    %c0_i32_0 = arith.constant 0 : i32
    %c0_i32_1 = arith.constant 0 : i32
    return %c0_i32, %c0_i32_0 : i32, i32
  }
  func.func @transform_8(%arg0: i32) -> (i32, i32) {
    %c0_i32 = arith.constant 0 : i32
    %c0_i32_0 = arith.constant 0 : i32
    %c0_i32_1 = arith.constant 0 : i32
    return %c0_i32, %c0_i32_0 : i32, i32
  }
  func.func @transform_9(%arg0: i32) -> (i32, i32) {
    %c0_i32 = arith.constant 0 : i32
    %c0_i32_0 = arith.constant 0 : i32
    return %arg0, %c0_i32 : i32, i32
  }
  func.func @transform_10(%arg0: i32) -> (i32, i32) {
    %c0_i32 = arith.constant 0 : i32
    %c0_i32_0 = arith.constant 0 : i32
    return %arg0, %c0_i32 : i32, i32
  }
}

</mosaic_0001>

<llo_original>
// kernel: tpu_custom_call.1
$region0: #{tpu_custom_call.1}
  #allocation0 [shape = 'u32[]', space=smem, size = 0x4, offset = 0x4, fixed_abs, tag = 'smem constant byte address 0x4 - core index']
  #allocation1 [shape = 'u32[144,128]{1,0:T(1,128)}', space=vmem, size = 0x12000, scoped, tag = 'internal scratch']
  #allocation2 [shape = 'f32[1,1]{1,0:T(1,128)S(1)}', space=vmem, size = 0x200, scoped, tag = 'scoped memory for tpu_custom_call.1']
  %s0 = inlined_call_operand.vmem [shape: bf16[768,14], index: 0, kind: input, shape index: {}]
  %s1 = inlined_call_operand.vmem [shape: f32[768,32], index: 1, kind: input, shape index: {}]
  %s2 = inlined_call_operand.vmem [shape: f32[48,16], index: 2, kind: input, shape index: {}]
  %s3 = inlined_call_operand.vmem [shape: f32[48,16], index: 3, kind: input, shape index: {}]
  %s4 = inlined_call_operand.vmem [shape: f32[32,16], index: 4, kind: input, shape index: {}]
  %s5 = inlined_call_operand.vmem [shape: bf16[14,16], index: 5, kind: input, shape index: {}]
  %s6 = inlined_call_operand.vmem [shape: f32[1,16], index: 6, kind: input, shape index: {}]
  %s7 = inlined_call_operand.vmem [shape: f32[1,16], index: 7, kind: input, shape index: {}]
  %s8 = inlined_call_operand.<no memory space> [shape: f32[1,1], index: 8, kind: input, shape index: {}]
  %s9 = inlined_call_operand.vmem [shape: f32[48,32], index: 9, kind: output, shape index: {0}]
  %s10 = inlined_call_operand.vmem [shape: f32[48,16], index: 10, kind: output, shape index: {1}]
  %11 = xla_tuple %s9, %s10
  %s12 = sld [smem:[#allocation0]]
  $region77: #{tpu_custom_call.1} parent=0
    _
  %s14 = ssub.s32 1, %s12
  %s15 = scalar_select 0, %s14, %s12
  %v16 = vstv %s8
  %17 = vst [vmem:[#allocation2] sm:$0x1] %v16
  loop: start=0, step=1, limit=5
  $region2: #{tpu_custom_call.1} parent=0 // loop_pre_header
    _
  $region3: #{tpu_custom_call.1} parent=0 // loop_header
    %s19 = sphi 0, %s23
    %p20 = scmp.ge.s32.totalorder %s19, 5
    %s29 = sphi 0, %s31
    %s32 = sphi 0, %s29
    %s33 = sphi 0, %s32
    %s49 = sphi 0, %s33
    %s55 = sphi 0, %s57
    %s58 = sphi 0, %s55
    %s59 = sphi 0, %s58
    %s75 = sphi 0, %s59
    %s81 = sphi 0, %s83
    %s84 = sphi 0, %s81
    %s85 = sphi 0, %s84
    %s101 = sphi 0, %s85
    %s107 = sphi 0, %s109
    %s110 = sphi 0, %s107
    %s111 = sphi 0, %s110
    %s127 = sphi 0, %s111
    %s131 = sphi 0, %s131
    %s133 = sphi 0, %s131
    %s134 = sphi 0, %s133
    %s148 = sphi 0, %s134
    %s152 = sphi 0, %s152
    %s154 = sphi 0, %s152
    %s155 = sphi 0, %s154
    %s169 = sphi 0, %s155
    %s173 = sphi 0, %s173
    %s175 = sphi 0, %s173
    %s176 = sphi 0, %s175
    %s190 = sphi 0, %s176
    %s194 = sphi 0, %s194
    %s196 = sphi 0, %s194
    %s197 = sphi 0, %s196
    %s211 = sphi 0, %s197
    %s215 = sphi 0, %s215
    %s217 = sphi 0, %s215
    %s218 = sphi 0, %s217
    %s232 = sphi 0, %s218
    %s238 = sphi 0, %s240
    %s241 = sphi 0, %s238
    %s242 = sphi 0, %s241
    %s258 = sphi 0, %s242
    %s264 = sphi 0, %s266
    %s267 = sphi 0, %s264
    %s268 = sphi 0, %s267
    %s284 = sphi 0, %s268
  $region4: #{tpu_custom_call.1} parent=0 // loop_header_branch
    %22 = sbr.rel (%p20) target = $region8
  $region5: #{tpu_custom_call.1} parent=0 // loop_body
    %s24 = ssub.s32 %s19, 1
    %s25 = ssub.s32 %s19, 2
    %s26 = sadd.s32 %s19, 1
    %s27 = ssub.s32 %s19, %s26
    %p28 = scmp.eq.s32.totalorder %s27, 0
    %s30 = sadd.s32 %s29, 1
    %s31 = scalar_select %p28, %s29, %s30
    %p34 = pneg %p28
    %p35 = scmp.eq.s32.totalorder %s19, 2
    %p36 = por %p34, %p35
    %p37 = scmp.ne.s32.totalorder %s29, %s32
    %p38 = scmp.eq.s32.totalorder %s19, 0
    %p39 = por %p37, %p38
    %p40 = scmp.ne.s32.totalorder %s29, %s32
    %p41 = scmp.eq.s32.totalorder %s24, 2
    %p42 = por %p40, %p41
    %p43 = scmp.ne.s32.totalorder %s32, %s33
    %p44 = scmp.eq.s32.totalorder %s24, 0
    %p45 = por %p43, %p44
    %p46 = scmp.ne.s32.totalorder %s32, %s33
    %p47 = scmp.eq.s32.totalorder %s25, 2
    %p48 = por %p46, %p47
    %p50 = scmp.ne.s32.totalorder %s33, %s49
    %p51 = scmp.eq.s32.totalorder %s25, 0
    %p52 = por %p50, %p51
    %s53 = ssub.s32 %s19, %s26
    %p54 = scmp.eq.s32.totalorder %s53, 0
    %s56 = sadd.s32 %s55, 1
    %s57 = scalar_select %p54, %s55, %s56
    %p60 = pneg %p54
    %p61 = scmp.eq.s32.totalorder %s19, 2
    %p62 = por %p60, %p61
    %p63 = scmp.ne.s32.totalorder %s55, %s58
    %p64 = scmp.eq.s32.totalorder %s19, 0
    %p65 = por %p63, %p64
    %p66 = scmp.ne.s32.totalorder %s55, %s58
    %p67 = scmp.eq.s32.totalorder %s24, 2
    %p68 = por %p66, %p67
    %p69 = scmp.ne.s32.totalorder %s58, %s59
    %p70 = scmp.eq.s32.totalorder %s24, 0
    %p71 = por %p69, %p70
    %p72 = scmp.ne.s32.totalorder %s58, %s59
    %p73 = scmp.eq.s32.totalorder %s25, 2
    %p74 = por %p72, %p73
    %p76 = scmp.ne.s32.totalorder %s59, %s75
    %p77 = scmp.eq.s32.totalorder %s25, 0
    %p78 = por %p76, %p77
    %s79 = ssub.s32 %s19, %s26
    %p80 = scmp.eq.s32.totalorder %s79, 0
    %s82 = sadd.s32 %s81, 1
    %s83 = scalar_select %p80, %s81, %s82
    %p86 = pneg %p80
    %p87 = scmp.eq.s32.totalorder %s19, 2
    %p88 = por %p86, %p87
    %p89 = scmp.ne.s32.totalorder %s81, %s84
    %p90 = scmp.eq.s32.totalorder %s19, 0
    %p91 = por %p89, %p90
    %p92 = scmp.ne.s32.totalorder %s81, %s84
    %p93 = scmp.eq.s32.totalorder %s24, 2
    %p94 = por %p92, %p93
    %p95 = scmp.ne.s32.totalorder %s84, %s85
    %p96 = scmp.eq.s32.totalorder %s24, 0
    %p97 = por %p95, %p96
    %p98 = scmp.ne.s32.totalorder %s84, %s85
    %p99 = scmp.eq.s32.totalorder %s25, 2
    %p100 = por %p98, %p99
    %p102 = scmp.ne.s32.totalorder %s85, %s101
    %p103 = scmp.eq.s32.totalorder %s25, 0
    %p104 = por %p102, %p103
    %s105 = ssub.s32 %s19, %s26
    %p106 = scmp.eq.s32.totalorder %s105, 0
    %s108 = sadd.s32 %s107, 1
    %s109 = scalar_select %p106, %s107, %s108
    %p112 = pneg %p106
    %p113 = scmp.eq.s32.totalorder %s19, 2
    %p114 = por %p112, %p113
    %p115 = scmp.ne.s32.totalorder %s107, %s110
    %p116 = scmp.eq.s32.totalorder %s19, 0
    %p117 = por %p115, %p116
    %p118 = scmp.ne.s32.totalorder %s107, %s110
    %p119 = scmp.eq.s32.totalorder %s24, 2
    %p120 = por %p118, %p119
    %p121 = scmp.ne.s32.totalorder %s110, %s111
    %p122 = scmp.eq.s32.totalorder %s24, 0
    %p123 = por %p121, %p122
    %p124 = scmp.ne.s32.totalorder %s110, %s111
    %p125 = scmp.eq.s32.totalorder %s25, 2
    %p126 = por %p124, %p125
    %p128 = scmp.ne.s32.totalorder %s111, %s127
    %p129 = scmp.eq.s32.totalorder %s25, 0
    %p130 = por %p128, %p129
    %s132 = sadd.s32 %s131, 1
    %p135 = scmp.eq.s32.totalorder %s19, 2
    %p136 = scmp.ne.s32.totalorder %s131, %s133
    %p137 = scmp.eq.s32.totalorder %s19, 0
    %p138 = por %p136, %p137
    %p139 = scmp.ne.s32.totalorder %s131, %s133
    %p140 = scmp.eq.s32.totalorder %s24, 2
    %p141 = por %p139, %p140
    %p142 = scmp.ne.s32.totalorder %s133, %s134
    %p143 = scmp.eq.s32.totalorder %s24, 0
    %p144 = por %p142, %p143
    %p145 = scmp.ne.s32.totalorder %s133, %s134
    %p146 = scmp.eq.s32.totalorder %s25, 2
    %p147 = por %p145, %p146
    %p149 = scmp.ne.s32.totalorder %s134, %s148
    %p150 = scmp.eq.s32.totalorder %s25, 0
    %p151 = por %p149, %p150
    %s153 = sadd.s32 %s152, 1
    %p156 = scmp.eq.s32.totalorder %s19, 2
    %p157 = scmp.ne.s32.totalorder %s152, %s154
    %p158 = scmp.eq.s32.totalorder %s19, 0
    %p159 = por %p157, %p158
    %p160 = scmp.ne.s32.totalorder %s152, %s154
    %p161 = scmp.eq.s32.totalorder %s24, 2
    %p162 = por %p160, %p161
    %p163 = scmp.ne.s32.totalorder %s154, %s155
    %p164 = scmp.eq.s32.totalorder %s24, 0
    %p165 = por %p163, %p164
    %p166 = scmp.ne.s32.totalorder %s154, %s155
    %p167 = scmp.eq.s32.totalorder %s25, 2
    %p168 = por %p166, %p167
    %p170 = scmp.ne.s32.totalorder %s155, %s169
    %p171 = scmp.eq.s32.totalorder %s25, 0
    %p172 = por %p170, %p171
    %s174 = sadd.s32 %s173, 1
    %p177 = scmp.eq.s32.totalorder %s19, 2
    %p178 = scmp.ne.s32.totalorder %s173, %s175
    %p179 = scmp.eq.s32.totalorder %s19, 0
    %p180 = por %p178, %p179
    %p181 = scmp.ne.s32.totalorder %s173, %s175
    %p182 = scmp.eq.s32.totalorder %s24, 2
    %p183 = por %p181, %p182
    %p184 = scmp.ne.s32.totalorder %s175, %s176
    %p185 = scmp.eq.s32.totalorder %s24, 0
    %p186 = por %p184, %p185
    %p187 = scmp.ne.s32.totalorder %s175, %s176
    %p188 = scmp.eq.s32.totalorder %s25, 2
    %p189 = por %p187, %p188
    %p191 = scmp.ne.s32.totalorder %s176, %s190
    %p192 = scmp.eq.s32.totalorder %s25, 0
    %p193 = por %p191, %p192
    %s195 = sadd.s32 %s194, 1
    %p198 = scmp.eq.s32.totalorder %s19, 2
    %p199 = scmp.ne.s32.totalorder %s194, %s196
    %p200 = scmp.eq.s32.totalorder %s19, 0
    %p201 = por %p199, %p200
    %p202 = scmp.ne.s32.totalorder %s194, %s196
    %p203 = scmp.eq.s32.totalorder %s24, 2
    %p204 = por %p202, %p203
    %p205 = scmp.ne.s32.totalorder %s196, %s197
    %p206 = scmp.eq.s32.totalorder %s24, 0
    %p207 = por %p205, %p206
    %p208 = scmp.ne.s32.totalorder %s196, %s197
    %p209 = scmp.eq.s32.totalorder %s25, 2
    %p210 = por %p208, %p209
    %p212 = scmp.ne.s32.totalorder %s197, %s211
    %p213 = scmp.eq.s32.totalorder %s25, 0
    %p214 = por %p212, %p213
    %s216 = sadd.s32 %s215, 1
    %p219 = scmp.eq.s32.totalorder %s19, 2
    %p220 = scmp.ne.s32.totalorder %s215, %s217
    %p221 = scmp.eq.s32.totalorder %s19, 0
    %p222 = por %p220, %p221
    %p223 = scmp.ne.s32.totalorder %s215, %s217
    %p224 = scmp.eq.s32.totalorder %s24, 2
    %p225 = por %p223, %p224
    %p226 = scmp.ne.s32.totalorder %s217, %s218
    %p227 = scmp.eq.s32.totalorder %s24, 0
    %p228 = por %p226, %p227
    %p229 = scmp.ne.s32.totalorder %s217, %s218
    %p230 = scmp.eq.s32.totalorder %s25, 2
    %p231 = por %p229, %p230
    %p233 = scmp.ne.s32.totalorder %s218, %s232
    %p234 = scmp.eq.s32.totalorder %s25, 0
    %p235 = por %p233, %p234
    %s236 = ssub.s32 %s19, %s26
    %p237 = scmp.eq.s32.totalorder %s236, 0
    %s239 = sadd.s32 %s238, 1
    %s240 = scalar_select %p237, %s238, %s239
    %p243 = pneg %p237
    %p244 = scmp.eq.s32.totalorder %s19, 2
    %p245 = por %p243, %p244
    %p246 = scmp.ne.s32.totalorder %s238, %s241
    %p247 = scmp.eq.s32.totalorder %s19, 0
    %p248 = por %p246, %p247
    %p249 = scmp.ne.s32.totalorder %s238, %s241
    %p250 = scmp.eq.s32.totalorder %s24, 2
    %p251 = por %p249, %p250
    %p252 = scmp.ne.s32.totalorder %s241, %s242
    %p253 = scmp.eq.s32.totalorder %s24, 0
    %p254 = por %p252, %p253
    %p255 = scmp.ne.s32.totalorder %s241, %s242
    %p256 = scmp.eq.s32.totalorder %s25, 2
    %p257 = por %p255, %p256
    %p259 = scmp.ne.s32.totalorder %s242, %s258
    %p260 = scmp.eq.s32.totalorder %s25, 0
    %p261 = por %p259, %p260
    %s262 = ssub.s32 %s19, %s26
    %p263 = scmp.eq.s32.totalorder %s262, 0
    %s265 = sadd.s32 %s264, 1
    %s266 = scalar_select %p263, %s264, %s265
    %p269 = pneg %p263
    %p270 = scmp.eq.s32.totalorder %s19, 2
    %p271 = por %p269, %p270
    %p272 = scmp.ne.s32.totalorder %s264, %s267
    %p273 = scmp.eq.s32.totalorder %s19, 0
    %p274 = por %p272, %p273
    %p275 = scmp.ne.s32.totalorder %s264, %s267
    %p276 = scmp.eq.s32.totalorder %s24, 2
    %p277 = por %p275, %p276
    %p278 = scmp.ne.s32.totalorder %s267, %s268
    %p279 = scmp.eq.s32.totalorder %s24, 0
    %p280 = por %p278, %p279
    %p281 = scmp.ne.s32.totalorder %s267, %s268
    %p282 = scmp.eq.s32.totalorder %s25, 2
    %p283 = por %p281, %p282
    %p285 = scmp.ne.s32.totalorder %s268, %s284
    %p286 = scmp.eq.s32.totalorder %s25, 0
    %p287 = por %p285, %p286
    %p288 = scmp.le.s32.totalorder 1, %s19
    %p289 = scmp.lt.s32.totalorder %s19, 4
    %p290 = pnand %p288, %p289
    %p291 = pneg %p290
    // Predicated region
    $region9: #{tpu_custom_call.1} parent=5 // pred_check
      _
    $region10: #{tpu_custom_call.1} parent=5 // pred_check_branch
      %293 = sbr.rel (%p290) target = $region12
    $region11: #{tpu_custom_call.1} parent=5 // pred_region
      %s294 = ssub.s32 %s19, 1
      // Predicated region
      $region13: #{tpu_custom_call.1} parent=11 // pred_check
        %p295 = pneg %p144
      $region14: #{tpu_custom_call.1} parent=11 // pred_check_branch
        %297 = sbr.rel (%p295) target = $region16
      $region15: #{tpu_custom_call.1} parent=11 // pred_region
        _
      $region16: #{tpu_custom_call.1} parent=11 // pred_fallthru
        _
      // Predicated region
      $region17: #{tpu_custom_call.1} parent=11 // pred_check
        %p298 = pneg %p165
      $region18: #{tpu_custom_call.1} parent=11 // pred_check_branch
        %300 = sbr.rel (%p298) target = $region20
      $region19: #{tpu_custom_call.1} parent=11 // pred_region
        _
      $region20: #{tpu_custom_call.1} parent=11 // pred_fallthru
        _
      // Predicated region
      $region21: #{tpu_custom_call.1} parent=11 // pred_check
        %p301 = pneg %p186
      $region22: #{tpu_custom_call.1} parent=11 // pred_check_branch
        %303 = sbr.rel (%p301) target = $region24
      $region23: #{tpu_custom_call.1} parent=11 // pred_region
        _
      $region24: #{tpu_custom_call.1} parent=11 // pred_fallthru
        _
      // Predicated region
      $region25: #{tpu_custom_call.1} parent=11 // pred_check
        %p304 = pneg %p207
      $region26: #{tpu_custom_call.1} parent=11 // pred_check_branch
        %306 = sbr.rel (%p304) target = $region28
      $region27: #{tpu_custom_call.1} parent=11 // pred_region
        _
      $region28: #{tpu_custom_call.1} parent=11 // pred_fallthru
        _
      // Predicated region
      $region29: #{tpu_custom_call.1} parent=11 // pred_check
        %p307 = pneg %p228
      $region30: #{tpu_custom_call.1} parent=11 // pred_check_branch
        %309 = sbr.rel (%p307) target = $region32
      $region31: #{tpu_custom_call.1} parent=11 // pred_region
        _
      $region32: #{tpu_custom_call.1} parent=11 // pred_fallthru
        _
    $region12: #{tpu_custom_call.1} parent=5 // pred_fallthru
      _
    %p310 = scmp.lt.s32.totalorder %s19, 3
    // Predicated region
    $region33: #{tpu_custom_call.1} parent=5 // pred_check
      %p311 = pneg %p310
    $region34: #{tpu_custom_call.1} parent=5 // pred_check_branch
      %313 = sbr.rel (%p311) target = $region36
    $region35: #{tpu_custom_call.1} parent=5 // pred_region
      // Predicated region
      $region37: #{tpu_custom_call.1} parent=35 // pred_check
        %p314 = pneg %p39
      $region38: #{tpu_custom_call.1} parent=35 // pred_check_branch
        %316 = sbr.rel (%p314) target = $region40
      $region39: #{tpu_custom_call.1} parent=35 // pred_region
        %s317 = smul.u32 32, %s19
        %p318 = scmp.lt.s32.totalorder %s317, 95
        %s319 = scalar_select %p318, %s317, 95
        %s320 = smul.addr %s319, 4
        %s321 = scalar_lea.vmem %s0, %s320
        %s322 = smul.u32 32, %s19
      $region40: #{tpu_custom_call.1} parent=35 // pred_fallthru
        _
      // Predicated region
      $region41: #{tpu_custom_call.1} parent=35 // pred_check
        %p323 = pneg %p65
      $region42: #{tpu_custom_call.1} parent=35 // pred_check_branch
        %325 = sbr.rel (%p323) target = $region44
      $region43: #{tpu_custom_call.1} parent=35 // pred_region
        %s326 = smul.u32 32, %s19
        %p327 = scmp.lt.s32.totalorder %s326, 95
        %s328 = scalar_select %p327, %s326, 95
        %s329 = smul.addr %s328, 8
        %s330 = scalar_lea.vmem %s1, %s329
        %s331 = smul.u32 32, %s19
      $region44: #{tpu_custom_call.1} parent=35 // pred_fallthru
        _
      // Predicated region
      $region45: #{tpu_custom_call.1} parent=35 // pred_check
        %p332 = pneg %p91
      $region46: #{tpu_custom_call.1} parent=35 // pred_check_branch
        %334 = sbr.rel (%p332) target = $region48
      $region47: #{tpu_custom_call.1} parent=35 // pred_region
        %s335 = smul.u32 2, %s19
        %p336 = scmp.lt.s32.totalorder %s335, 5
        %s337 = scalar_select %p336, %s335, 5
        %s338 = smul.addr %s337, 8
        %s339 = scalar_lea.vmem %s2, %s338
        %s340 = smul.u32 2, %s19
      $region48: #{tpu_custom_call.1} parent=35 // pred_fallthru
        _
      // Predicated region
      $region49: #{tpu_custom_call.1} parent=35 // pred_check
        %p341 = pneg %p117
      $region50: #{tpu_custom_call.1} parent=35 // pred_check_branch
        %343 = sbr.rel (%p341) target = $region52
      $region51: #{tpu_custom_call.1} parent=35 // pred_region
        %s344 = smul.u32 2, %s19
        %p345 = scmp.lt.s32.totalorder %s344, 5
        %s346 = scalar_select %p345, %s344, 5
        %s347 = smul.addr %s346, 8
        %s348 = scalar_lea.vmem %s3, %s347
        %s349 = smul.u32 2, %s19
      $region52: #{tpu_custom_call.1} parent=35 // pred_fallthru
        _
    $region36: #{tpu_custom_call.1} parent=5 // pred_fallthru
      _
    %p350 = scmp.le.s32.totalorder 1, %s19
    %p351 = scmp.lt.s32.totalorder %s19, 4
    %p352 = pnand %p350, %p351
    %p353 = pneg %p352
    // Predicated region
    $region53: #{tpu_custom_call.1} parent=5 // pred_check
      _
    $region54: #{tpu_custom_call.1} parent=5 // pred_check_branch
      %355 = sbr.rel (%p352) target = $region56
    $region55: #{tpu_custom_call.1} parent=5 // pred_region
      %s356 = ssub.s32 %s19, 1
      %s357 = smul.u32 32, %s24
      %p358 = scmp.lt.s32.totalorder %s357, 95
      %s359 = scalar_select %p358, %s357, 95
      %s360 = smul.addr %s359, 4
      %s361 = scalar_lea.vmem %s0, %s360
      %p362 = pneg %p45
      %p363 = pneg %p42
      %s364 = smul.u32 32, %s24
      %p365 = scmp.lt.s32.totalorder %s364, 95
      %s366 = scalar_select %p365, %s364, 95
      %s367 = smul.addr %s366, 8
      %s368 = scalar_lea.vmem %s1, %s367
      %p369 = pneg %p71
      %p370 = pneg %p68
      %s371 = smul.u32 2, %s24
      %p372 = scmp.lt.s32.totalorder %s371, 5
      %s373 = scalar_select %p372, %s371, 5
      %s374 = smul.addr %s373, 8
      %s375 = scalar_lea.vmem %s2, %s374
      %p376 = pneg %p97
      %p377 = pneg %p94
      %s378 = smul.u32 2, %s24
      %p379 = scmp.lt.s32.totalorder %s378, 5
      %s380 = scalar_select %p379, %s378, 5
      %s381 = smul.addr %s380, 8
      %s382 = scalar_lea.vmem %s3, %s381
      %p383 = pneg %p123
      %p384 = pneg %p120
      %p385 = pneg %p144
      %p386 = pneg %p141
      %p387 = pneg %p165
      %p388 = pneg %p162
      %p389 = pneg %p186
      %p390 = pneg %p183
      %p391 = pneg %p207
      %p392 = pneg %p204
      %p393 = pneg %p228
      %p394 = pneg %p225
      %p395 = pneg %p254
      %p396 = pneg %p251
      %s397 = smul.u32 2, %s24
      %p398 = scmp.lt.s32.totalorder %s397, 5
      %s399 = scalar_select %p398, %s397, 5
      %s400 = smul.addr %s399, 8
      %s401 = scalar_lea.vmem %s9, %s400
      %p402 = pneg %p280
      %p403 = pneg %p277
      %s404 = smul.u32 2, %s24
      %p405 = scmp.lt.s32.totalorder %s404, 5
      %s406 = scalar_select %p405, %s404, 5
      %s407 = smul.addr %s406, 8
      %s408 = scalar_lea.vmem %s10, %s407
      %s409 = smul.u32 32, %s24
      %p410 = scmp.lt.s32.totalorder %s409, 95
      %s411 = scalar_select %p410, %s409, 95
      %s412 = smul.addr %s411, 4
      %s413 = scalar_lea.vmem %s0, %s412
      %s414 = smul.u32 32, %s24
      %s415 = smul.u32 32, %s24
      %p416 = scmp.lt.s32.totalorder %s415, 95
      %s417 = scalar_select %p416, %s415, 95
      %s418 = smul.addr %s417, 8
      %s419 = scalar_lea.vmem %s1, %s418
      %s420 = smul.u32 32, %s24
      %s421 = smul.u32 2, %s24
      %p422 = scmp.lt.s32.totalorder %s421, 5
      %s423 = scalar_select %p422, %s421, 5
      %s424 = smul.addr %s423, 8
      %s425 = scalar_lea.vmem %s2, %s424
      %s426 = smul.u32 2, %s24
      %s427 = smul.u32 2, %s24
      %p428 = scmp.lt.s32.totalorder %s427, 5
      %s429 = scalar_select %p428, %s427, 5
      %s430 = smul.addr %s429, 8
      %s431 = scalar_lea.vmem %s3, %s430
      %s432 = smul.u32 2, %s24
      %s433 = smul.u32 2, %s24
      %p434 = scmp.lt.s32.totalorder %s433, 5
      %s435 = scalar_select %p434, %s433, 5
      %s436 = smul.addr %s435, 8
      %s437 = scalar_lea.vmem %s9, %s436
      %s438 = smul.u32 2, %s24
      %s439 = smul.u32 2, %s24
      %p440 = scmp.lt.s32.totalorder %s439, 5
      %s441 = scalar_select %p440, %s439, 5
      %s442 = smul.addr %s441, 8
      %s443 = scalar_lea.vmem %s10, %s442
      %s444 = smul.u32 2, %s24
      %v446 = vld [vmem:[%s419] sm:$0xff]
      %v447 = vld [vmem:[%s419 + $0x8] sm:$0xff]
      %v448 = vld [vmem:[%s419 + $0x10] sm:$0xff]
      %v449 = vld [vmem:[%s419 + $0x18] sm:$0xff]
      %v450 = vld [vmem:[%s419 + $0x20] sm:$0xff]
      %v451 = vld [vmem:[%s419 + $0x28] sm:$0xff]
      %v452 = vld [vmem:[%s419 + $0x30] sm:$0xff]
      %v453 = vld [vmem:[%s419 + $0x38] sm:$0xff]
      %v454 = vld [vmem:[%s419 + $0x40] sm:$0xff]
      %v455 = vld [vmem:[%s419 + $0x48] sm:$0xff]
      %v456 = vld [vmem:[%s419 + $0x50] sm:$0xff]
      %v457 = vld [vmem:[%s419 + $0x58] sm:$0xff]
      %v458 = vld [vmem:[%s419 + $0x60] sm:$0xff]
      %v459 = vld [vmem:[%s419 + $0x68] sm:$0xff]
      %v460 = vld [vmem:[%s419 + $0x70] sm:$0xff]
      %v461 = vld [vmem:[%s419 + $0x78] sm:$0xff]
      %v462 = vld [vmem:[%s419 + $0x80] sm:$0xff]
      %v463 = vld [vmem:[%s419 + $0x88] sm:$0xff]
      %v464 = vld [vmem:[%s419 + $0x90] sm:$0xff]
      %v465 = vld [vmem:[%s419 + $0x98] sm:$0xff]
      %v466 = vld [vmem:[%s419 + $0xa0] sm:$0xff]
      %v467 = vld [vmem:[%s419 + $0xa8] sm:$0xff]
      %v468 = vld [vmem:[%s419 + $0xb0] sm:$0xff]
      %v469 = vld [vmem:[%s419 + $0xb8] sm:$0xff]
      %v470 = vld [vmem:[%s419 + $0xc0] sm:$0xff]
      %v471 = vld [vmem:[%s419 + $0xc8] sm:$0xff]
      %v472 = vld [vmem:[%s419 + $0xd0] sm:$0xff]
      %v473 = vld [vmem:[%s419 + $0xd8] sm:$0xff]
      %v474 = vld [vmem:[%s419 + $0xe0] sm:$0xff]
      %v475 = vld [vmem:[%s419 + $0xe8] sm:$0xff]
      %v476 = vld [vmem:[%s419 + $0xf0] sm:$0xff]
      %v477 = vld [vmem:[%s419 + $0xf8] sm:$0xff]
      %v478 = vld [vmem:[%s4] sm:$0xff]
      %v479 = vld [vmem:[%s4 + $0x8] sm:$0xff]
      %v480 = vld [vmem:[%s4 + $0x10] sm:$0xff]
      %v481 = vld [vmem:[%s4 + $0x18] sm:$0xff]
      %v482 = vld [vmem:[%s413] sm:$0xf]
      %v483 = vld [vmem:[%s413 + $0x4] sm:$0xf]
      %v484 = vld [vmem:[%s413 + $0x8] sm:$0xf]
      %v485 = vld [vmem:[%s413 + $0xc] sm:$0xf]
      %v486 = vld [vmem:[%s413 + $0x10] sm:$0xf]
      %v487 = vld [vmem:[%s413 + $0x14] sm:$0xf]
      %v488 = vld [vmem:[%s413 + $0x18] sm:$0xf]
      %v489 = vld [vmem:[%s413 + $0x1c] sm:$0xf]
      %v490 = vld [vmem:[%s413 + $0x20] sm:$0xf]
      %v491 = vld [vmem:[%s413 + $0x24] sm:$0xf]
      %v492 = vld [vmem:[%s413 + $0x28] sm:$0xf]
      %v493 = vld [vmem:[%s413 + $0x2c] sm:$0xf]
      %v494 = vld [vmem:[%s413 + $0x30] sm:$0xf]
      %v495 = vld [vmem:[%s413 + $0x34] sm:$0xf]
      %v496 = vld [vmem:[%s413 + $0x38] sm:$0xf]
      %v497 = vld [vmem:[%s413 + $0x3c] sm:$0xf]
      %v498 = vld [vmem:[%s413 + $0x40] sm:$0xf]
      %v499 = vld [vmem:[%s413 + $0x44] sm:$0xf]
      %v500 = vld [vmem:[%s413 + $0x48] sm:$0xf]
      %v501 = vld [vmem:[%s413 + $0x4c] sm:$0xf]
      %v502 = vld [vmem:[%s413 + $0x50] sm:$0xf]
      %v503 = vld [vmem:[%s413 + $0x54] sm:$0xf]
      %v504 = vld [vmem:[%s413 + $0x58] sm:$0xf]
      %v505 = vld [vmem:[%s413 + $0x5c] sm:$0xf]
      %v506 = vld [vmem:[%s413 + $0x60] sm:$0xf]
      %v507 = vld [vmem:[%s413 + $0x64] sm:$0xf]
      %v508 = vld [vmem:[%s413 + $0x68] sm:$0xf]
      %v509 = vld [vmem:[%s413 + $0x6c] sm:$0xf]
      %v510 = vld [vmem:[%s413 + $0x70] sm:$0xf]
      %v511 = vld [vmem:[%s413 + $0x74] sm:$0xf]
      %v512 = vld [vmem:[%s413 + $0x78] sm:$0xf]
      %v513 = vld [vmem:[%s413 + $0x7c] sm:$0xf]
      %v514 = vld [vmem:[%s5] sm:$0xf]
      %v515 = vld [vmem:[%s5 + $0x4] sm:$0x7]
      %v548 = vunpack.c.l.b16 %v482
      %v549 = vunpack.c.l.b16 %v483
      %v550 = vunpack.c.l.b16 %v484
      %v551 = vunpack.c.l.b16 %v485
      %v552 = vunpack.c.l.b16 %v486
      %v553 = vunpack.c.l.b16 %v487
      %v554 = vunpack.c.l.b16 %v488
      %v555 = vunpack.c.l.b16 %v489
      %v556 = vunpack.c.l.b16 %v490
      %v557 = vunpack.c.l.b16 %v491
      %v558 = vunpack.c.l.b16 %v492
      %v559 = vunpack.c.l.b16 %v493
      %v560 = vunpack.c.l.b16 %v494
      %v561 = vunpack.c.l.b16 %v495
      %v562 = vunpack.c.l.b16 %v496
      %v563 = vunpack.c.l.b16 %v497
      %v564 = vunpack.c.l.b16 %v498
      %v565 = vunpack.c.l.b16 %v499
      %v566 = vunpack.c.l.b16 %v500
      %v567 = vunpack.c.l.b16 %v501
      %v568 = vunpack.c.l.b16 %v502
      %v569 = vunpack.c.l.b16 %v503
      %v570 = vunpack.c.l.b16 %v504
      %v571 = vunpack.c.l.b16 %v505
      %v572 = vunpack.c.l.b16 %v506
      %v573 = vunpack.c.l.b16 %v507
      %v574 = vunpack.c.l.b16 %v508
      %v575 = vunpack.c.l.b16 %v509
      %v576 = vunpack.c.l.b16 %v510
      %v577 = vunpack.c.l.b16 %v511
      %v578 = vunpack.c.l.b16 %v512
      %v579 = vunpack.c.l.b16 %v513
      %v580 = vpack.c.b16 %v549, %v548
      %v581 = vpack.c.b16 %v551, %v550
      %v582 = vpack.c.b16 %v553, %v552
      %v583 = vpack.c.b16 %v555, %v554
      %v584 = vpack.c.b16 %v557, %v556
      %v585 = vpack.c.b16 %v559, %v558
      %v586 = vpack.c.b16 %v561, %v560
      %v587 = vpack.c.b16 %v563, %v562
      %v588 = vpack.c.b16 %v565, %v564
      %v589 = vpack.c.b16 %v567, %v566
      %v590 = vpack.c.b16 %v569, %v568
      %v591 = vpack.c.b16 %v571, %v570
      %v592 = vpack.c.b16 %v573, %v572
      %v593 = vpack.c.b16 %v575, %v574
      %v594 = vpack.c.b16 %v577, %v576
      %v595 = vpack.c.b16 %v579, %v578
      %v598 = vunpack.c.l.b16 %v514
      %v599 = vunpack.c.l.b16 %v515
      %v600 = vpack.c.b16 %v599, %v598
      %vm601 = vcmask 113664
      %v603 = vsel %vm601, %v580, 0
      %v606 = vsel %vm601, %v581, 0
      %v609 = vsel %vm601, %v582, 0
      %v612 = vsel %vm601, %v583, 0
      %v615 = vsel %vm601, %v584, 0
      %v618 = vsel %vm601, %v585, 0
      %v621 = vsel %vm601, %v586, 0
      %v624 = vsel %vm601, %v587, 0
      %v627 = vsel %vm601, %v588, 0
      %v630 = vsel %vm601, %v589, 0
      %v633 = vsel %vm601, %v590, 0
      %v636 = vsel %vm601, %v591, 0
      %v639 = vsel %vm601, %v592, 0
      %v642 = vsel %vm601, %v593, 0
      %v645 = vsel %vm601, %v594, 0
      %v648 = vsel %vm601, %v595, 0
      %vm650 = vcmask 1046528
      %v652 = vsel %vm650, %v600, 0
      %654 = vmatprep.subr.bf16.mxu0 0
      %655 = vmatpush1.bf16.msra.mxu0 0
      %656 = vmatprep.subr.bf16.mxu0 0
      %657 = vmatpush1.bf16.msra.mxu0 0
      %658 = vmatprep.subr.bf16.mxu0 0
      %659 = vmatpush1.bf16.msra.mxu0 0
      %660 = vmatprep.subr.bf16.mxu0 0
      %661 = vmatpush1.bf16.msra.mxu0 0
      %662 = vmatprep.subr.bf16.mxu0 0
      %663 = vmatpush1.bf16.msra.mxu0 0
      %664 = vmatprep.subr.bf16.mxu0 0
      %665 = vmatpush1.bf16.msra.mxu0 0
      %666 = vmatprep.subr.bf16.mxu0 0
      %667 = vmatpush1.bf16.msra.mxu0 0
      %668 = vmatprep.subr.bf16.mxu0 0
      %669 = vmatpush1.bf16.msra.mxu0 %v652
      %670 = vmatprep.subr.bf16.mxu0 0
      %671 = vmatpush2.bf16.msra.mxu0 0
      %672 = vmatprep.subr.bf16.mxu0 0
      %673 = vmatpush2.bf16.msra.mxu0 0
      %674 = vmatprep.subr.bf16.mxu0 0
      %675 = vmatpush2.bf16.msra.mxu0 0
      %676 = vmatprep.subr.bf16.mxu0 0
      %677 = vmatpush2.bf16.msra.mxu0 0
      %678 = vmatprep.subr.bf16.mxu0 0
      %679 = vmatpush2.bf16.msra.mxu0 0
      %680 = vmatprep.subr.bf16.mxu0 0
      %681 = vmatpush2.bf16.msra.mxu0 0
      %682 = vmatprep.subr.bf16.mxu0 0
      %683 = vmatpush2.bf16.msra.mxu0 0
      %684 = vmatprep.subr.bf16.mxu0 0
      %685 = vmatpush2.bf16.msra.mxu0 0
      %686 = vmatprep.mubr.bf16.mxu0 0
      %687 = vmatmul.mubr.bf16.gmra.mxu0 %v603
      %v688 = vpop.f32.mrf.mxu0
      %v689 = vadd.f32 0.0, %v688
      %v690 = vpop.f32.mrf.mxu0
      %v691 = vpop.f32.mrf.mxu0
      %v692 = vadd.f32 0.0, %v691
      %v693 = vpop.f32.mrf.mxu0
      %694 = vmatprep.mubr.bf16.mxu0 0
      %695 = vmatmul.mubr.bf16.gmra.mxu0 %v606
      %v696 = vpop.f32.mrf.mxu0
      %v697 = vadd.f32 0.0, %v696
      %v698 = vpop.f32.mrf.mxu0
      %v699 = vpop.f32.mrf.mxu0
      %v700 = vadd.f32 0.0, %v699
      %v701 = vpop.f32.mrf.mxu0
      %702 = vmatprep.mubr.bf16.mxu0 0
      %703 = vmatmul.mubr.bf16.gmra.mxu0 %v609
      %v704 = vpop.f32.mrf.mxu0
      %v705 = vadd.f32 0.0, %v704
      %v706 = vpop.f32.mrf.mxu0
      %v707 = vpop.f32.mrf.mxu0
      %v708 = vadd.f32 0.0, %v707
      %v709 = vpop.f32.mrf.mxu0
      %710 = vmatprep.mubr.bf16.mxu0 0
      %711 = vmatmul.mubr.bf16.gmra.mxu0 %v612
      %v712 = vpop.f32.mrf.mxu0
      %v713 = vadd.f32 0.0, %v712
      %v714 = vpop.f32.mrf.mxu0
      %v715 = vpop.f32.mrf.mxu0
      %v716 = vadd.f32 0.0, %v715
      %v717 = vpop.f32.mrf.mxu0
      %718 = vmatprep.mubr.bf16.mxu0 0
      %719 = vmatmul.mubr.bf16.gmra.mxu0 %v615
      %v720 = vpop.f32.mrf.mxu0
      %v721 = vadd.f32 0.0, %v720
      %v722 = vpop.f32.mrf.mxu0
      %v723 = vpop.f32.mrf.mxu0
      %v724 = vadd.f32 0.0, %v723
      %v725 = vpop.f32.mrf.mxu0
      %726 = vmatprep.mubr.bf16.mxu0 0
      %727 = vmatmul.mubr.bf16.gmra.mxu0 %v618
      %v728 = vpop.f32.mrf.mxu0
      %v729 = vadd.f32 0.0, %v728
      %v730 = vpop.f32.mrf.mxu0
      %v731 = vpop.f32.mrf.mxu0
      %v732 = vadd.f32 0.0, %v731
      %v733 = vpop.f32.mrf.mxu0
      %734 = vmatprep.mubr.bf16.mxu0 0
      %735 = vmatmul.mubr.bf16.gmra.mxu0 %v621
      %v736 = vpop.f32.mrf.mxu0
      %v737 = vadd.f32 0.0, %v736
      %v738 = vpop.f32.mrf.mxu0
      %v739 = vpop.f32.mrf.mxu0
      %v740 = vadd.f32 0.0, %v739
      %v741 = vpop.f32.mrf.mxu0
      %742 = vmatprep.mubr.bf16.mxu0 0
      %743 = vmatmul.mubr.bf16.gmra.mxu0 %v624
      %v744 = vpop.f32.mrf.mxu0
      %v745 = vadd.f32 0.0, %v744
      %v746 = vpop.f32.mrf.mxu0
      %v747 = vpop.f32.mrf.mxu0
      %v748 = vadd.f32 0.0, %v747
      %v749 = vpop.f32.mrf.mxu0
      %750 = vmatprep.mubr.bf16.mxu0 0
      %751 = vmatmul.mubr.bf16.gmra.mxu0 %v627
      %v752 = vpop.f32.mrf.mxu0
      %v753 = vadd.f32 0.0, %v752
      %v754 = vpop.f32.mrf.mxu0
      %v755 = vpop.f32.mrf.mxu0
      %v756 = vadd.f32 0.0, %v755
      %v757 = vpop.f32.mrf.mxu0
      %758 = vmatprep.mubr.bf16.mxu0 0
      %759 = vmatmul.mubr.bf16.gmra.mxu0 %v630
      %v760 = vpop.f32.mrf.mxu0
      %v761 = vadd.f32 0.0, %v760
      %v762 = vpop.f32.mrf.mxu0
      %v763 = vpop.f32.mrf.mxu0
      %v764 = vadd.f32 0.0, %v763
      %v765 = vpop.f32.mrf.mxu0
      %766 = vmatprep.mubr.bf16.mxu0 0
      %767 = vmatmul.mubr.bf16.gmra.mxu0 %v633
      %v768 = vpop.f32.mrf.mxu0
      %v769 = vadd.f32 0.0, %v768
      %v770 = vpop.f32.mrf.mxu0
      %v771 = vpop.f32.mrf.mxu0
      %v772 = vadd.f32 0.0, %v771
      %v773 = vpop.f32.mrf.mxu0
      %774 = vmatprep.mubr.bf16.mxu0 0
      %775 = vmatmul.mubr.bf16.gmra.mxu0 %v636
      %v776 = vpop.f32.mrf.mxu0
      %v777 = vadd.f32 0.0, %v776
      %v778 = vpop.f32.mrf.mxu0
      %v779 = vpop.f32.mrf.mxu0
      %v780 = vadd.f32 0.0, %v779
      %v781 = vpop.f32.mrf.mxu0
      %782 = vmatprep.mubr.bf16.mxu0 0
      %783 = vmatmul.mubr.bf16.gmra.mxu0 %v639
      %v784 = vpop.f32.mrf.mxu0
      %v785 = vadd.f32 0.0, %v784
      %v786 = vpop.f32.mrf.mxu0
      %v787 = vpop.f32.mrf.mxu0
      %v788 = vadd.f32 0.0, %v787
      %v789 = vpop.f32.mrf.mxu0
      %790 = vmatprep.mubr.bf16.mxu0 0
      %791 = vmatmul.mubr.bf16.gmra.mxu0 %v642
      %v792 = vpop.f32.mrf.mxu0
      %v793 = vadd.f32 0.0, %v792
      %v794 = vpop.f32.mrf.mxu0
      %v795 = vpop.f32.mrf.mxu0
      %v796 = vadd.f32 0.0, %v795
      %v797 = vpop.f32.mrf.mxu0
      %798 = vmatprep.mubr.bf16.mxu0 0
      %799 = vmatmul.mubr.bf16.gmra.mxu0 %v645
      %v800 = vpop.f32.mrf.mxu0
      %v801 = vadd.f32 0.0, %v800
      %v802 = vpop.f32.mrf.mxu0
      %v803 = vpop.f32.mrf.mxu0
      %v804 = vadd.f32 0.0, %v803
      %v805 = vpop.f32.mrf.mxu0
      %806 = vmatprep.mubr.bf16.mxu0 0
      %807 = vmatmul.mubr.bf16.gmra.mxu0 %v648
      %v808 = vpop.f32.mrf.mxu0
      %v809 = vadd.f32 0.0, %v808
      %v810 = vpop.f32.mrf.mxu0
      %v811 = vpop.f32.mrf.mxu0
      %v812 = vadd.f32 0.0, %v811
      %v813 = vpop.f32.mrf.mxu0
      %814 = vdwg.mxu0
      %vm815 = vcmask 261120
      %v817 = vsel %vm815, %v446, 0
      %v820 = vsel %vm815, %v447, 0
      %v823 = vsel %vm815, %v448, 0
      %v826 = vsel %vm815, %v449, 0
      %v829 = vsel %vm815, %v450, 0
      %v832 = vsel %vm815, %v451, 0
      %v835 = vsel %vm815, %v452, 0
      %v838 = vsel %vm815, %v453, 0
      %v841 = vsel %vm815, %v454, 0
      %v844 = vsel %vm815, %v455, 0
      %v847 = vsel %vm815, %v456, 0
      %v850 = vsel %vm815, %v457, 0
      %v853 = vsel %vm815, %v458, 0
      %v856 = vsel %vm815, %v459, 0
      %v859 = vsel %vm815, %v460, 0
      %v862 = vsel %vm815, %v461, 0
      %v865 = vsel %vm815, %v462, 0
      %v868 = vsel %vm815, %v463, 0
      %v871 = vsel %vm815, %v464, 0
      %v874 = vsel %vm815, %v465, 0
      %v877 = vsel %vm815, %v466, 0
      %v880 = vsel %vm815, %v467, 0
      %v883 = vsel %vm815, %v468, 0
      %v886 = vsel %vm815, %v469, 0
      %v889 = vsel %vm815, %v470, 0
      %v892 = vsel %vm815, %v471, 0
      %v895 = vsel %vm815, %v472, 0
      %v898 = vsel %vm815, %v473, 0
      %v901 = vsel %vm815, %v474, 0
      %v904 = vsel %vm815, %v475, 0
      %v907 = vsel %vm815, %v476, 0
      %v910 = vsel %vm815, %v477, 0
      %912 = vmatprep.subr.mxu0 0.0
      %913 = vmatpush1.msra.mxu0 0.0
      %914 = vmatprep.subr.mxu0 0.0
      %915 = vmatpush1.msra.mxu0 0.0
      %916 = vmatprep.subr.mxu0 0.0
      %917 = vmatpush1.msra.mxu0 0.0
      %918 = vmatprep.subr.mxu0 0.0
      %919 = vmatpush1.msra.mxu0 0.0
      %920 = vmatprep.subr.mxu0 0.0
      %921 = vmatpush1.msra.mxu0 0.0
      %922 = vmatprep.subr.mxu0 0.0
      %923 = vmatpush1.msra.mxu0 0.0
      %924 = vmatprep.subr.mxu0 0.0
      %925 = vmatpush1.msra.mxu0 0.0
      %926 = vmatprep.subr.mxu0 0.0
      %927 = vmatpush1.msra.mxu0 0.0
      %928 = vmatprep.subr.mxu0 0.0
      %929 = vmatpush1.msra.mxu0 0.0
      %930 = vmatprep.subr.mxu0 0.0
      %931 = vmatpush1.msra.mxu0 0.0
      %932 = vmatprep.subr.mxu0 0.0
      %933 = vmatpush1.msra.mxu0 0.0
      %934 = vmatprep.subr.mxu0 0.0
      %935 = vmatpush1.msra.mxu0 0.0
      %936 = vmatprep.subr.mxu0 0.0
      %937 = vmatpush1.msra.mxu0 %v481
      %938 = vmatprep.subr.mxu0 0.0
      %939 = vmatpush1.msra.mxu0 %v480
      %940 = vmatprep.subr.mxu0 0.0
      %941 = vmatpush1.msra.mxu0 %v479
      %942 = vmatprep.subr.mxu0 0.0
      %943 = vmatpush1.msra.mxu0 %v478
      %944 = vmatprep.subr.mxu0 0.0
      %945 = vmatpush2.msra.mxu0 0.0
      %946 = vmatprep.subr.mxu0 0.0
      %947 = vmatpush2.msra.mxu0 0.0
      %948 = vmatprep.subr.mxu0 0.0
      %949 = vmatpush2.msra.mxu0 0.0
      %950 = vmatprep.subr.mxu0 0.0
      %951 = vmatpush2.msra.mxu0 0.0
      %952 = vmatprep.subr.mxu0 0.0
      %953 = vmatpush2.msra.mxu0 0.0
      %954 = vmatprep.subr.mxu0 0.0
      %955 = vmatpush2.msra.mxu0 0.0
      %956 = vmatprep.subr.mxu0 0.0
      %957 = vmatpush2.msra.mxu0 0.0
      %958 = vmatprep.subr.mxu0 0.0
      %959 = vmatpush2.msra.mxu0 0.0
      %960 = vmatprep.subr.mxu0 0.0
      %961 = vmatpush2.msra.mxu0 0.0
      %962 = vmatprep.subr.mxu0 0.0
      %963 = vmatpush2.msra.mxu0 0.0
      %964 = vmatprep.subr.mxu0 0.0
      %965 = vmatpush2.msra.mxu0 0.0
      %966 = vmatprep.subr.mxu0 0.0
      %967 = vmatpush2.msra.mxu0 0.0
      %968 = vmatprep.subr.mxu0 0.0
      %969 = vmatpush2.msra.mxu0 0.0
      %970 = vmatprep.subr.mxu0 0.0
      %971 = vmatpush2.msra.mxu0 0.0
      %972 = vmatprep.subr.mxu0 0.0
      %973 = vmatpush2.msra.mxu0 0.0
      %974 = vmatprep.subr.mxu0 0.0
      %975 = vmatpush2.msra.mxu0 0.0
      %976 = vmatprep.mubr.f32.mxu0 0.0
      %977 = vmatmul.mubr.f32.gmra.mxu0 %v817
      %v978 = vpop.f32.mrf.mxu0
      %v979 = vadd.f32 %v689, %v978
      %v980 = vpop.f32.mrf.mxu0
      %981 = vmatprep.mubr.f32.mxu0 0.0
      %982 = vmatmul.mubr.f32.gmra.mxu0 %v820
      %v983 = vpop.f32.mrf.mxu0
      %v984 = vadd.f32 %v692, %v983
      %v985 = vpop.f32.mrf.mxu0
      %986 = vmatprep.mubr.f32.mxu0 0.0
      %987 = vmatmul.mubr.f32.gmra.mxu0 %v823
      %v988 = vpop.f32.mrf.mxu0
      %v989 = vadd.f32 %v697, %v988
      %v990 = vpop.f32.mrf.mxu0
      %991 = vmatprep.mubr.f32.mxu0 0.0
      %992 = vmatmul.mubr.f32.gmra.mxu0 %v826
      %v993 = vpop.f32.mrf.mxu0
      %v994 = vadd.f32 %v700, %v993
      %v995 = vpop.f32.mrf.mxu0
      %996 = vmatprep.mubr.f32.mxu0 0.0
      %997 = vmatmul.mubr.f32.gmra.mxu0 %v829
      %v998 = vpop.f32.mrf.mxu0
      %v999 = vadd.f32 %v705, %v998
      %v1000 = vpop.f32.mrf.mxu0
      %1001 = vmatprep.mubr.f32.mxu0 0.0
      %1002 = vmatmul.mubr.f32.gmra.mxu0 %v832
      %v1003 = vpop.f32.mrf.mxu0
      %v1004 = vadd.f32 %v708, %v1003
      %v1005 = vpop.f32.mrf.mxu0
      %1006 = vmatprep.mubr.f32.mxu0 0.0
      %1007 = vmatmul.mubr.f32.gmra.mxu0 %v835
      %v1008 = vpop.f32.mrf.mxu0
      %v1009 = vadd.f32 %v713, %v1008
      %v1010 = vpop.f32.mrf.mxu0
      %1011 = vmatprep.mubr.f32.mxu0 0.0
      %1012 = vmatmul.mubr.f32.gmra.mxu0 %v838
      %v1013 = vpop.f32.mrf.mxu0
      %v1014 = vadd.f32 %v716, %v1013
      %v1015 = vpop.f32.mrf.mxu0
      %1016 = vmatprep.mubr.f32.mxu0 0.0
      %1017 = vmatmul.mubr.f32.gmra.mxu0 %v841
      %v1018 = vpop.f32.mrf.mxu0
      %v1019 = vadd.f32 %v721, %v1018
      %v1020 = vpop.f32.mrf.mxu0
      %1021 = vmatprep.mubr.f32.mxu0 0.0
      %1022 = vmatmul.mubr.f32.gmra.mxu0 %v844
      %v1023 = vpop.f32.mrf.mxu0
      %v1024 = vadd.f32 %v724, %v1023
      %v1025 = vpop.f32.mrf.mxu0
      %1026 = vmatprep.mubr.f32.mxu0 0.0
      %1027 = vmatmul.mubr.f32.gmra.mxu0 %v847
      %v1028 = vpop.f32.mrf.mxu0
      %v1029 = vadd.f32 %v729, %v1028
      %v1030 = vpop.f32.mrf.mxu0
      %1031 = vmatprep.mubr.f32.mxu0 0.0
      %1032 = vmatmul.mubr.f32.gmra.mxu0 %v850
      %v1033 = vpop.f32.mrf.mxu0
      %v1034 = vadd.f32 %v732, %v1033
      %v1035 = vpop.f32.mrf.mxu0
      %1036 = vmatprep.mubr.f32.mxu0 0.0
      %1037 = vmatmul.mubr.f32.gmra.mxu0 %v853
      %v1038 = vpop.f32.mrf.mxu0
      %v1039 = vadd.f32 %v737, %v1038
      %v1040 = vpop.f32.mrf.mxu0
      %1041 = vmatprep.mubr.f32.mxu0 0.0
      %1042 = vmatmul.mubr.f32.gmra.mxu0 %v856
      %v1043 = vpop.f32.mrf.mxu0
      %v1044 = vadd.f32 %v740, %v1043
      %v1045 = vpop.f32.mrf.mxu0
      %1046 = vmatprep.mubr.f32.mxu0 0.0
      %1047 = vmatmul.mubr.f32.gmra.mxu0 %v859
      %v1048 = vpop.f32.mrf.mxu0
      %v1049 = vadd.f32 %v745, %v1048
      %v1050 = vpop.f32.mrf.mxu0
      %1051 = vmatprep.mubr.f32.mxu0 0.0
      %1052 = vmatmul.mubr.f32.gmra.mxu0 %v862
      %v1053 = vpop.f32.mrf.mxu0
      %v1054 = vadd.f32 %v748, %v1053
      %v1055 = vpop.f32.mrf.mxu0
      %1056 = vmatprep.mubr.f32.mxu0 0.0
      %1057 = vmatmul.mubr.f32.gmra.mxu0 %v865
      %v1058 = vpop.f32.mrf.mxu0
      %v1059 = vadd.f32 %v753, %v1058
      %v1060 = vpop.f32.mrf.mxu0
      %1061 = vmatprep.mubr.f32.mxu0 0.0
      %1062 = vmatmul.mubr.f32.gmra.mxu0 %v868
      %v1063 = vpop.f32.mrf.mxu0
      %v1064 = vadd.f32 %v756, %v1063
      %v1065 = vpop.f32.mrf.mxu0
      %1066 = vmatprep.mubr.f32.mxu0 0.0
      %1067 = vmatmul.mubr.f32.gmra.mxu0 %v871
      %v1068 = vpop.f32.mrf.mxu0
      %v1069 = vadd.f32 %v761, %v1068
      %v1070 = vpop.f32.mrf.mxu0
      %1071 = vmatprep.mubr.f32.mxu0 0.0
      %1072 = vmatmul.mubr.f32.gmra.mxu0 %v874
      %v1073 = vpop.f32.mrf.mxu0
      %v1074 = vadd.f32 %v764, %v1073
      %v1075 = vpop.f32.mrf.mxu0
      %1076 = vmatprep.mubr.f32.mxu0 0.0
      %1077 = vmatmul.mubr.f32.gmra.mxu0 %v877
      %v1078 = vpop.f32.mrf.mxu0
      %v1079 = vadd.f32 %v769, %v1078
      %v1080 = vpop.f32.mrf.mxu0
      %1081 = vmatprep.mubr.f32.mxu0 0.0
      %1082 = vmatmul.mubr.f32.gmra.mxu0 %v880
      %v1083 = vpop.f32.mrf.mxu0
      %v1084 = vadd.f32 %v772, %v1083
      %v1085 = vpop.f32.mrf.mxu0
      %1086 = vmatprep.mubr.f32.mxu0 0.0
      %1087 = vmatmul.mubr.f32.gmra.mxu0 %v883
      %v1088 = vpop.f32.mrf.mxu0
      %v1089 = vadd.f32 %v777, %v1088
      %v1090 = vpop.f32.mrf.mxu0
      %1091 = vmatprep.mubr.f32.mxu0 0.0
      %1092 = vmatmul.mubr.f32.gmra.mxu0 %v886
      %v1093 = vpop.f32.mrf.mxu0
      %v1094 = vadd.f32 %v780, %v1093
      %v1095 = vpop.f32.mrf.mxu0
      %1096 = vmatprep.mubr.f32.mxu0 0.0
      %1097 = vmatmul.mubr.f32.gmra.mxu0 %v889
      %v1098 = vpop.f32.mrf.mxu0
      %v1099 = vadd.f32 %v785, %v1098
      %v1100 = vpop.f32.mrf.mxu0
      %1101 = vmatprep.mubr.f32.mxu0 0.0
      %1102 = vmatmul.mubr.f32.gmra.mxu0 %v892
      %v1103 = vpop.f32.mrf.mxu0
      %v1104 = vadd.f32 %v788, %v1103
      %v1105 = vpop.f32.mrf.mxu0
      %1106 = vmatprep.mubr.f32.mxu0 0.0
      %1107 = vmatmul.mubr.f32.gmra.mxu0 %v895
      %v1108 = vpop.f32.mrf.mxu0
      %v1109 = vadd.f32 %v793, %v1108
      %v1110 = vpop.f32.mrf.mxu0
      %1111 = vmatprep.mubr.f32.mxu0 0.0
      %1112 = vmatmul.mubr.f32.gmra.mxu0 %v898
      %v1113 = vpop.f32.mrf.mxu0
      %v1114 = vadd.f32 %v796, %v1113
      %v1115 = vpop.f32.mrf.mxu0
      %1116 = vmatprep.mubr.f32.mxu0 0.0
      %1117 = vmatmul.mubr.f32.gmra.mxu0 %v901
      %v1118 = vpop.f32.mrf.mxu0
      %v1119 = vadd.f32 %v801, %v1118
      %v1120 = vpop.f32.mrf.mxu0
      %1121 = vmatprep.mubr.f32.mxu0 0.0
      %1122 = vmatmul.mubr.f32.gmra.mxu0 %v904
      %v1123 = vpop.f32.mrf.mxu0
      %v1124 = vadd.f32 %v804, %v1123
      %v1125 = vpop.f32.mrf.mxu0
      %1126 = vmatprep.mubr.f32.mxu0 0.0
      %1127 = vmatmul.mubr.f32.gmra.mxu0 %v907
      %v1128 = vpop.f32.mrf.mxu0
      %v1129 = vadd.f32 %v809, %v1128
      %v1130 = vpop.f32.mrf.mxu0
      %1131 = vmatprep.mubr.f32.mxu0 0.0
      %1132 = vmatmul.mubr.f32.gmra.mxu0 %v910
      %v1133 = vpop.f32.mrf.mxu0
      %v1134 = vadd.f32 %v812, %v1133
      %v1135 = vpop.f32.mrf.mxu0
      %1136 = vdwg.mxu0
      %v1137 = vld [vmem:[%s425] sm:$0xff]
      %v1138 = vld [vmem:[%s425 + $0x8] sm:$0xff]
      %v1141 = vcombine.high %v1137, %v1137
      %v1143 = vunpack.c.l.s4 1966171168
      %v1144 = vunpack.c.0.s8 %v1143
      %v1145 = vlaneseq
      %v1146 = vshrl.u32 %v1145, 7
      %v1147 = vsub.s32 %v1144, %v1146
      %v1148 = vrot.slane %v1137, %v1147
      %v1150 = vunpack.c.l.s4 1966171168
      %v1151 = vunpack.c.0.s8 %v1150
      %v1152 = vlaneseq
      %v1153 = vshrl.u32 %v1152, 7
      %v1154 = vsub.s32 %v1151, %v1153
      %v1155 = vrot.slane %v1141, %v1154
      %v1156 = vcombine.high %v1148, %v1148
      %v1157 = vcombine.high %v1155, %v1155
      %v1159 = vunpack.c.l.s4 1966171168
      %v1160 = vunpack.c.0.s8 %v1159
      %v1161 = vlaneseq
      %v1162 = vshrl.u32 %v1161, 7
      %v1163 = vsub.s32 %v1160, %v1162
      %v1164 = vrot.slane %v1148, %v1163
      %v1166 = vunpack.c.l.s4 1966171168
      %v1167 = vunpack.c.0.s8 %v1166
      %v1168 = vlaneseq
      %v1169 = vshrl.u32 %v1168, 7
      %v1170 = vsub.s32 %v1167, %v1169
      %v1171 = vrot.slane %v1155, %v1170
      %v1173 = vunpack.c.l.s4 1966171168
      %v1174 = vunpack.c.0.s8 %v1173
      %v1175 = vlaneseq
      %v1176 = vshrl.u32 %v1175, 7
      %v1177 = vsub.s32 %v1174, %v1176
      %v1178 = vrot.slane %v1156, %v1177
      %v1180 = vunpack.c.l.s4 1966171168
      %v1181 = vunpack.c.0.s8 %v1180
      %v1182 = vlaneseq
      %v1183 = vshrl.u32 %v1182, 7
      %v1184 = vsub.s32 %v1181, %v1183
      %v1185 = vrot.slane %v1157, %v1184
      %v1186 = vcombine.high %v1164, %v1164
      %v1187 = vcombine.high %v1171, %v1171
      %v1188 = vcombine.high %v1178, %v1178
      %v1189 = vcombine.high %v1185, %v1185
      %v1190 = vcombine.high %v1138, %v1138
      %v1192 = vunpack.c.l.s4 1966171168
      %v1193 = vunpack.c.0.s8 %v1192
      %v1194 = vlaneseq
      %v1195 = vshrl.u32 %v1194, 7
      %v1196 = vsub.s32 %v1193, %v1195
      %v1197 = vrot.slane %v1138, %v1196
      %v1199 = vunpack.c.l.s4 1966171168
      %v1200 = vunpack.c.0.s8 %v1199
      %v1201 = vlaneseq
      %v1202 = vshrl.u32 %v1201, 7
      %v1203 = vsub.s32 %v1200, %v1202
      %v1204 = vrot.slane %v1190, %v1203
      %v1205 = vcombine.high %v1197, %v1197
      %v1206 = vcombine.high %v1204, %v1204
      %v1208 = vunpack.c.l.s4 1966171168
      %v1209 = vunpack.c.0.s8 %v1208
      %v1210 = vlaneseq
      %v1211 = vshrl.u32 %v1210, 7
      %v1212 = vsub.s32 %v1209, %v1211
      %v1213 = vrot.slane %v1197, %v1212
      %v1215 = vunpack.c.l.s4 1966171168
      %v1216 = vunpack.c.0.s8 %v1215
      %v1217 = vlaneseq
      %v1218 = vshrl.u32 %v1217, 7
      %v1219 = vsub.s32 %v1216, %v1218
      %v1220 = vrot.slane %v1204, %v1219
      %v1222 = vunpack.c.l.s4 1966171168
      %v1223 = vunpack.c.0.s8 %v1222
      %v1224 = vlaneseq
      %v1225 = vshrl.u32 %v1224, 7
      %v1226 = vsub.s32 %v1223, %v1225
      %v1227 = vrot.slane %v1205, %v1226
      %v1229 = vunpack.c.l.s4 1966171168
      %v1230 = vunpack.c.0.s8 %v1229
      %v1231 = vlaneseq
      %v1232 = vshrl.u32 %v1231, 7
      %v1233 = vsub.s32 %v1230, %v1232
      %v1234 = vrot.slane %v1206, %v1233
      %v1235 = vcombine.high %v1213, %v1213
      %v1236 = vcombine.high %v1220, %v1220
      %v1237 = vcombine.high %v1227, %v1227
      %v1238 = vcombine.high %v1234, %v1234
      %v1239 = vlaneseq
      %v1240 = vshrl.u32 %v1239, 7
      %v1241 = vsub.s32 0, %v1240
      %v1242 = vrot.slane %v1164, %v1241
      %v1243 = vlaneseq
      %v1244 = vshrl.u32 %v1243, 7
      %v1245 = vsub.s32 0, %v1244
      %v1246 = vrot.slane %v1178, %v1245
      %v1247 = vlaneseq
      %v1248 = vshrl.u32 %v1247, 7
      %v1249 = vsub.s32 0, %v1248
      %v1250 = vrot.slane %v1186, %v1249
      %v1251 = vlaneseq
      %v1252 = vshrl.u32 %v1251, 7
      %v1253 = vsub.s32 0, %v1252
      %v1254 = vrot.slane %v1188, %v1253
      %v1255 = vlaneseq
      %v1256 = vshrl.u32 %v1255, 7
      %v1257 = vsub.s32 0, %v1256
      %v1258 = vrot.slane %v1171, %v1257
      %v1259 = vlaneseq
      %v1260 = vshrl.u32 %v1259, 7
      %v1261 = vsub.s32 0, %v1260
      %v1262 = vrot.slane %v1185, %v1261
      %v1263 = vlaneseq
      %v1264 = vshrl.u32 %v1263, 7
      %v1265 = vsub.s32 0, %v1264
      %v1266 = vrot.slane %v1187, %v1265
      %v1267 = vlaneseq
      %v1268 = vshrl.u32 %v1267, 7
      %v1269 = vsub.s32 0, %v1268
      %v1270 = vrot.slane %v1189, %v1269
      %v1271 = vlaneseq
      %v1272 = vshrl.u32 %v1271, 7
      %v1273 = vsub.s32 0, %v1272
      %v1274 = vrot.slane %v1213, %v1273
      %v1275 = vlaneseq
      %v1276 = vshrl.u32 %v1275, 7
      %v1277 = vsub.s32 0, %v1276
      %v1278 = vrot.slane %v1227, %v1277
      %v1279 = vlaneseq
      %v1280 = vshrl.u32 %v1279, 7
      %v1281 = vsub.s32 0, %v1280
      %v1282 = vrot.slane %v1235, %v1281
      %v1283 = vlaneseq
      %v1284 = vshrl.u32 %v1283, 7
      %v1285 = vsub.s32 0, %v1284
      %v1286 = vrot.slane %v1237, %v1285
      %v1287 = vlaneseq
      %v1288 = vshrl.u32 %v1287, 7
      %v1289 = vsub.s32 0, %v1288
      %v1290 = vrot.slane %v1220, %v1289
      %v1291 = vlaneseq
      %v1292 = vshrl.u32 %v1291, 7
      %v1293 = vsub.s32 0, %v1292
      %v1294 = vrot.slane %v1234, %v1293
      %v1295 = vlaneseq
      %v1296 = vshrl.u32 %v1295, 7
      %v1297 = vsub.s32 0, %v1296
      %v1298 = vrot.slane %v1236, %v1297
      %v1299 = vlaneseq
      %v1300 = vshrl.u32 %v1299, 7
      %v1301 = vsub.s32 0, %v1300
      %v1302 = vrot.slane %v1238, %v1301
      %v1319 = vadd.f32 %v979, %v1242
      %v1320 = vadd.f32 %v984, %v1242
      %v1321 = vadd.f32 %v989, %v1246
      %v1322 = vadd.f32 %v994, %v1246
      %v1323 = vadd.f32 %v999, %v1250
      %v1324 = vadd.f32 %v1004, %v1250
      %v1325 = vadd.f32 %v1009, %v1254
      %v1326 = vadd.f32 %v1014, %v1254
      %v1327 = vadd.f32 %v1019, %v1258
      %v1328 = vadd.f32 %v1024, %v1258
      %v1329 = vadd.f32 %v1029, %v1262
      %v1330 = vadd.f32 %v1034, %v1262
      %v1331 = vadd.f32 %v1039, %v1266
      %v1332 = vadd.f32 %v1044, %v1266
      %v1333 = vadd.f32 %v1049, %v1270
      %v1334 = vadd.f32 %v1054, %v1270
      %v1335 = vadd.f32 %v1059, %v1274
      %v1336 = vadd.f32 %v1064, %v1274
      %v1337 = vadd.f32 %v1069, %v1278
      %v1338 = vadd.f32 %v1074, %v1278
      %v1339 = vadd.f32 %v1079, %v1282
      %v1340 = vadd.f32 %v1084, %v1282
      %v1341 = vadd.f32 %v1089, %v1286
      %v1342 = vadd.f32 %v1094, %v1286
      %v1343 = vadd.f32 %v1099, %v1290
      %v1344 = vadd.f32 %v1104, %v1290
      %v1345 = vadd.f32 %v1109, %v1294
      %v1346 = vadd.f32 %v1114, %v1294
      %v1347 = vadd.f32 %v1119, %v1298
      %v1348 = vadd.f32 %v1124, %v1298
      %v1349 = vadd.f32 %v1129, %v1302
      %v1350 = vadd.f32 %v1134, %v1302
      %v1351 = vld [vmem:[%s6] sm:$0x1]
      %v1353 = vlaneseq
      %v1354 = vshrl.u32 %v1353, 7
      %v1355 = vsub.s32 0, %v1354
      %v1356 = vrot.slane %v1351, %v1355
      %v1358 = vadd.f32 %v1319, %v1356
      %v1359 = vadd.f32 %v1320, %v1356
      %v1360 = vadd.f32 %v1321, %v1356
      %v1361 = vadd.f32 %v1322, %v1356
      %v1362 = vadd.f32 %v1323, %v1356
      %v1363 = vadd.f32 %v1324, %v1356
      %v1364 = vadd.f32 %v1325, %v1356
      %v1365 = vadd.f32 %v1326, %v1356
      %v1366 = vadd.f32 %v1327, %v1356
      %v1367 = vadd.f32 %v1328, %v1356
      %v1368 = vadd.f32 %v1329, %v1356
      %v1369 = vadd.f32 %v1330, %v1356
      %v1370 = vadd.f32 %v1331, %v1356
      %v1371 = vadd.f32 %v1332, %v1356
      %v1372 = vadd.f32 %v1333, %v1356
      %v1373 = vadd.f32 %v1334, %v1356
      %v1374 = vadd.f32 %v1335, %v1356
      %v1375 = vadd.f32 %v1336, %v1356
      %v1376 = vadd.f32 %v1337, %v1356
      %v1377 = vadd.f32 %v1338, %v1356
      %v1378 = vadd.f32 %v1339, %v1356
      %v1379 = vadd.f32 %v1340, %v1356
      %v1380 = vadd.f32 %v1341, %v1356
      %v1381 = vadd.f32 %v1342, %v1356
      %v1382 = vadd.f32 %v1343, %v1356
      %v1383 = vadd.f32 %v1344, %v1356
      %v1384 = vadd.f32 %v1345, %v1356
      %v1385 = vadd.f32 %v1346, %v1356
      %v1386 = vadd.f32 %v1347, %v1356
      %v1387 = vadd.f32 %v1348, %v1356
      %v1388 = vadd.f32 %v1349, %v1356
      %v1389 = vadd.f32 %v1350, %v1356
      %v1390 = vtanh.pop %v1358
      %v1391 = vtanh.pop %v1359
      %v1392 = vtanh.pop %v1360
      %v1393 = vtanh.pop %v1361
      %v1394 = vtanh.pop %v1362
      %v1395 = vtanh.pop %v1363
      %v1396 = vtanh.pop %v1364
      %v1397 = vtanh.pop %v1365
      %v1398 = vtanh.pop %v1366
      %v1399 = vtanh.pop %v1367
      %v1400 = vtanh.pop %v1368
      %v1401 = vtanh.pop %v1369
      %v1402 = vtanh.pop %v1370
      %v1403 = vtanh.pop %v1371
      %v1404 = vtanh.pop %v1372
      %v1405 = vtanh.pop %v1373
      %v1406 = vtanh.pop %v1374
      %v1407 = vtanh.pop %v1375
      %v1408 = vtanh.pop %v1376
      %v1409 = vtanh.pop %v1377
      %v1410 = vtanh.pop %v1378
      %v1411 = vtanh.pop %v1379
      %v1412 = vtanh.pop %v1380
      %v1413 = vtanh.pop %v1381
      %v1414 = vtanh.pop %v1382
      %v1415 = vtanh.pop %v1383
      %v1416 = vtanh.pop %v1384
      %v1417 = vtanh.pop %v1385
      %v1418 = vtanh.pop %v1386
      %v1419 = vtanh.pop %v1387
      %v1420 = vtanh.pop %v1388
      %v1421 = vtanh.pop %v1389
      %v1422 = vld [vmem:[%s7] sm:$0x1]
      %v1424 = vlaneseq
      %v1425 = vshrl.u32 %v1424, 7
      %v1426 = vsub.s32 0, %v1425
      %v1427 = vrot.slane %v1422, %v1426
      %v1429 = vmul.f32 %v1390, %v1427
      %v1430 = vmul.f32 %v1391, %v1427
      %v1431 = vmul.f32 %v1392, %v1427
      %v1432 = vmul.f32 %v1393, %v1427
      %v1433 = vmul.f32 %v1394, %v1427
      %v1434 = vmul.f32 %v1395, %v1427
      %v1435 = vmul.f32 %v1396, %v1427
      %v1436 = vmul.f32 %v1397, %v1427
      %v1437 = vmul.f32 %v1398, %v1427
      %v1438 = vmul.f32 %v1399, %v1427
      %v1439 = vmul.f32 %v1400, %v1427
      %v1440 = vmul.f32 %v1401, %v1427
      %v1441 = vmul.f32 %v1402, %v1427
      %v1442 = vmul.f32 %v1403, %v1427
      %v1443 = vmul.f32 %v1404, %v1427
      %v1444 = vmul.f32 %v1405, %v1427
      %v1445 = vmul.f32 %v1406, %v1427
      %v1446 = vmul.f32 %v1407, %v1427
      %v1447 = vmul.f32 %v1408, %v1427
      %v1448 = vmul.f32 %v1409, %v1427
      %v1449 = vmul.f32 %v1410, %v1427
      %v1450 = vmul.f32 %v1411, %v1427
      %v1451 = vmul.f32 %v1412, %v1427
      %v1452 = vmul.f32 %v1413, %v1427
      %v1453 = vmul.f32 %v1414, %v1427
      %v1454 = vmul.f32 %v1415, %v1427
      %v1455 = vmul.f32 %v1416, %v1427
      %v1456 = vmul.f32 %v1417, %v1427
      %v1457 = vmul.f32 %v1418, %v1427
      %v1458 = vmul.f32 %v1419, %v1427
      %v1459 = vmul.f32 %v1420, %v1427
      %v1460 = vmul.f32 %v1421, %v1427
      %vm1461 = vcmask 130048
      %v1462 = vsel %vm1461, %v1429, 0.0
      %1463 = vadd.xlane.f32.xlu0 %v1462
      %v1464 = vpop.xlane.xlu0 %1463
      %v1465 = vsel %vm1461, %v1430, 0.0
      %1466 = vadd.xlane.f32.xlu0 %v1465
      %v1467 = vpop.xlane.xlu0 %1466
      %v1468 = vsel %vm1461, %v1431, 0.0
      %1469 = vadd.xlane.f32.xlu0 %v1468
      %v1470 = vpop.xlane.xlu0 %1469
      %v1471 = vsel %vm1461, %v1432, 0.0
      %1472 = vadd.xlane.f32.xlu0 %v1471
      %v1473 = vpop.xlane.xlu0 %1472
      %v1474 = vsel %vm1461, %v1433, 0.0
      %1475 = vadd.xlane.f32.xlu0 %v1474
      %v1476 = vpop.xlane.xlu0 %1475
      %v1477 = vsel %vm1461, %v1434, 0.0
      %1478 = vadd.xlane.f32.xlu0 %v1477
      %v1479 = vpop.xlane.xlu0 %1478
      %v1480 = vsel %vm1461, %v1435, 0.0
      %1481 = vadd.xlane.f32.xlu0 %v1480
      %v1482 = vpop.xlane.xlu0 %1481
      %v1483 = vsel %vm1461, %v1436, 0.0
      %1484 = vadd.xlane.f32.xlu0 %v1483
      %v1485 = vpop.xlane.xlu0 %1484
      %v1486 = vsel %vm1461, %v1437, 0.0
      %1487 = vadd.xlane.f32.xlu0 %v1486
      %v1488 = vpop.xlane.xlu0 %1487
      %v1489 = vsel %vm1461, %v1438, 0.0
      %1490 = vadd.xlane.f32.xlu0 %v1489
      %v1491 = vpop.xlane.xlu0 %1490
      %v1492 = vsel %vm1461, %v1439, 0.0
      %1493 = vadd.xlane.f32.xlu0 %v1492
      %v1494 = vpop.xlane.xlu0 %1493
      %v1495 = vsel %vm1461, %v1440, 0.0
      %1496 = vadd.xlane.f32.xlu0 %v1495
      %v1497 = vpop.xlane.xlu0 %1496
      %v1498 = vsel %vm1461, %v1441, 0.0
      %1499 = vadd.xlane.f32.xlu0 %v1498
      %v1500 = vpop.xlane.xlu0 %1499
      %v1501 = vsel %vm1461, %v1442, 0.0
      %1502 = vadd.xlane.f32.xlu0 %v1501
      %v1503 = vpop.xlane.xlu0 %1502
      %v1504 = vsel %vm1461, %v1443, 0.0
      %1505 = vadd.xlane.f32.xlu0 %v1504
      %v1506 = vpop.xlane.xlu0 %1505
      %v1507 = vsel %vm1461, %v1444, 0.0
      %1508 = vadd.xlane.f32.xlu0 %v1507
      %v1509 = vpop.xlane.xlu0 %1508
      %v1510 = vsel %vm1461, %v1445, 0.0
      %1511 = vadd.xlane.f32.xlu0 %v1510
      %v1512 = vpop.xlane.xlu0 %1511
      %v1513 = vsel %vm1461, %v1446, 0.0
      %1514 = vadd.xlane.f32.xlu0 %v1513
      %v1515 = vpop.xlane.xlu0 %1514
      %v1516 = vsel %vm1461, %v1447, 0.0
      %1517 = vadd.xlane.f32.xlu0 %v1516
      %v1518 = vpop.xlane.xlu0 %1517
      %v1519 = vsel %vm1461, %v1448, 0.0
      %1520 = vadd.xlane.f32.xlu0 %v1519
      %v1521 = vpop.xlane.xlu0 %1520
      %v1522 = vsel %vm1461, %v1449, 0.0
      %1523 = vadd.xlane.f32.xlu0 %v1522
      %v1524 = vpop.xlane.xlu0 %1523
      %v1525 = vsel %vm1461, %v1450, 0.0
      %1526 = vadd.xlane.f32.xlu0 %v1525
      %v1527 = vpop.xlane.xlu0 %1526
      %v1528 = vsel %vm1461, %v1451, 0.0
      %1529 = vadd.xlane.f32.xlu0 %v1528
      %v1530 = vpop.xlane.xlu0 %1529
      %v1531 = vsel %vm1461, %v1452, 0.0
      %1532 = vadd.xlane.f32.xlu0 %v1531
      %v1533 = vpop.xlane.xlu0 %1532
      %v1534 = vsel %vm1461, %v1453, 0.0
      %1535 = vadd.xlane.f32.xlu0 %v1534
      %v1536 = vpop.xlane.xlu0 %1535
      %v1537 = vsel %vm1461, %v1454, 0.0
      %1538 = vadd.xlane.f32.xlu0 %v1537
      %v1539 = vpop.xlane.xlu0 %1538
      %v1540 = vsel %vm1461, %v1455, 0.0
      %1541 = vadd.xlane.f32.xlu0 %v1540
      %v1542 = vpop.xlane.xlu0 %1541
      %v1543 = vsel %vm1461, %v1456, 0.0
      %1544 = vadd.xlane.f32.xlu0 %v1543
      %v1545 = vpop.xlane.xlu0 %1544
      %v1546 = vsel %vm1461, %v1457, 0.0
      %1547 = vadd.xlane.f32.xlu0 %v1546
      %v1548 = vpop.xlane.xlu0 %1547
      %v1549 = vsel %vm1461, %v1458, 0.0
      %1550 = vadd.xlane.f32.xlu0 %v1549
      %v1551 = vpop.xlane.xlu0 %1550
      %v1552 = vsel %vm1461, %v1459, 0.0
      %1553 = vadd.xlane.f32.xlu0 %v1552
      %v1554 = vpop.xlane.xlu0 %1553
      %v1555 = vsel %vm1461, %v1460, 0.0
      %1556 = vadd.xlane.f32.xlu0 %v1555
      %v1557 = vpop.xlane.xlu0 %1556
      %v1558 = vld [vmem:[#allocation2] sm:$0x1]
      %v1560 = vlaneseq
      %v1561 = vshrl.u32 %v1560, 7
      %v1562 = vsub.s32 0, %v1561
      %v1563 = vrot.slane %v1558, %v1562
      %1564 = vset.pattern.permute.xlu0 0
      %1565 = vperm.xlu0 %1564, %v1563
      %v1566 = vpop.permute.xlu0 %1565
      %v1568 = vadd.f32 %v1464, %v1566
      %v1569 = vadd.f32 %v1467, %v1566
      %v1570 = vadd.f32 %v1470, %v1566
      %v1571 = vadd.f32 %v1473, %v1566
      %v1572 = vadd.f32 %v1476, %v1566
      %v1573 = vadd.f32 %v1479, %v1566
      %v1574 = vadd.f32 %v1482, %v1566
      %v1575 = vadd.f32 %v1485, %v1566
      %v1576 = vadd.f32 %v1488, %v1566
      %v1577 = vadd.f32 %v1491, %v1566
      %v1578 = vadd.f32 %v1494, %v1566
      %v1579 = vadd.f32 %v1497, %v1566
      %v1580 = vadd.f32 %v1500, %v1566
      %v1581 = vadd.f32 %v1503, %v1566
      %v1582 = vadd.f32 %v1506, %v1566
      %v1583 = vadd.f32 %v1509, %v1566
      %v1584 = vadd.f32 %v1512, %v1566
      %v1585 = vadd.f32 %v1515, %v1566
      %v1586 = vadd.f32 %v1518, %v1566
      %v1587 = vadd.f32 %v1521, %v1566
      %v1588 = vadd.f32 %v1524, %v1566
      %v1589 = vadd.f32 %v1527, %v1566
      %v1590 = vadd.f32 %v1530, %v1566
      %v1591 = vadd.f32 %v1533, %v1566
      %v1592 = vadd.f32 %v1536, %v1566
      %v1593 = vadd.f32 %v1539, %v1566
      %v1594 = vadd.f32 %v1542, %v1566
      %v1595 = vadd.f32 %v1545, %v1566
      %v1596 = vadd.f32 %v1548, %v1566
      %v1597 = vadd.f32 %v1551, %v1566
      %v1598 = vadd.f32 %v1554, %v1566
      %v1599 = vadd.f32 %v1557, %v1566
      %v1600 = vld [vmem:[%s431] sm:$0xff]
      %v1601 = vld [vmem:[%s431 + $0x8] sm:$0xff]
      %vm1602 = vcmp.gt.f32.partialorder %v1600, 0.5
      %vm1603 = vcmp.gt.f32.partialorder %v1601, 0.5
      %v1636 = vlaneseq
      %v1637 = vand.u32 %v1636, 127
      %v1638 = vlaneseq
      %v1639 = vshrl.u32 %v1638, 7
      %v1640 = vsub.s32 %v1637, %v1639
      %v1641 = vrot.slane %v1568, %v1640
      %v1642 = vadd.s32 %v1637, 4294967288
      %v1643 = vlaneseq
      %v1644 = vshrl.u32 %v1643, 7
      %v1645 = vsub.s32 %v1642, %v1644
      %v1646 = vrot.slane %v1569, %v1645
      %vm1647 = vcmask 130112
      %v1648 = vsel %vm1647, %v1646, %v1641
      %v1649 = vlaneseq
      %v1650 = vshrl.u32 %v1649, 7
      %v1651 = vsub.s32 %v1637, %v1650
      %v1652 = vrot.slane %v1570, %v1651
      %v1653 = vlaneseq
      %v1654 = vshrl.u32 %v1653, 7
      %v1655 = vsub.s32 %v1642, %v1654
      %v1656 = vrot.slane %v1571, %v1655
      %v1657 = vsel %vm1647, %v1656, %v1652
      %v1658 = vlaneseq
      %v1659 = vshrl.u32 %v1658, 7
      %v1660 = vsub.s32 %v1637, %v1659
      %v1661 = vrot.slane %v1572, %v1660
      %v1662 = vlaneseq
      %v1663 = vshrl.u32 %v1662, 7
      %v1664 = vsub.s32 %v1642, %v1663
      %v1665 = vrot.slane %v1573, %v1664
      %v1666 = vsel %vm1647, %v1665, %v1661
      %v1667 = vlaneseq
      %v1668 = vshrl.u32 %v1667, 7
      %v1669 = vsub.s32 %v1637, %v1668
      %v1670 = vrot.slane %v1574, %v1669
      %v1671 = vlaneseq
      %v1672 = vshrl.u32 %v1671, 7
      %v1673 = vsub.s32 %v1642, %v1672
      %v1674 = vrot.slane %v1575, %v1673
      %v1675 = vsel %vm1647, %v1674, %v1670
      %v1676 = vlaneseq
      %v1677 = vshrl.u32 %v1676, 7
      %v1678 = vsub.s32 %v1637, %v1677
      %v1679 = vrot.slane %v1576, %v1678
      %v1680 = vlaneseq
      %v1681 = vshrl.u32 %v1680, 7
      %v1682 = vsub.s32 %v1642, %v1681
      %v1683 = vrot.slane %v1577, %v1682
      %v1684 = vsel %vm1647, %v1683, %v1679
      %v1685 = vlaneseq
      %v1686 = vshrl.u32 %v1685, 7
      %v1687 = vsub.s32 %v1637, %v1686
      %v1688 = vrot.slane %v1578, %v1687
      %v1689 = vlaneseq
      %v1690 = vshrl.u32 %v1689, 7
      %v1691 = vsub.s32 %v1642, %v1690
      %v1692 = vrot.slane %v1579, %v1691
      %v1693 = vsel %vm1647, %v1692, %v1688
      %v1694 = vlaneseq
      %v1695 = vshrl.u32 %v1694, 7
      %v1696 = vsub.s32 %v1637, %v1695
      %v1697 = vrot.slane %v1580, %v1696
      %v1698 = vlaneseq
      %v1699 = vshrl.u32 %v1698, 7
      %v1700 = vsub.s32 %v1642, %v1699
      %v1701 = vrot.slane %v1581, %v1700
      %v1702 = vsel %vm1647, %v1701, %v1697
      %v1703 = vlaneseq
      %v1704 = vshrl.u32 %v1703, 7
      %v1705 = vsub.s32 %v1637, %v1704
      %v1706 = vrot.slane %v1582, %v1705
      %v1707 = vlaneseq
      %v1708 = vshrl.u32 %v1707, 7
      %v1709 = vsub.s32 %v1642, %v1708
      %v1710 = vrot.slane %v1583, %v1709
      %v1711 = vsel %vm1647, %v1710, %v1706
      %v1712 = vlaneseq
      %v1713 = vshrl.u32 %v1712, 7
      %v1714 = vsub.s32 %v1637, %v1713
      %v1715 = vrot.slane %v1584, %v1714
      %v1716 = vlaneseq
      %v1717 = vshrl.u32 %v1716, 7
      %v1718 = vsub.s32 %v1642, %v1717
      %v1719 = vrot.slane %v1585, %v1718
      %v1720 = vsel %vm1647, %v1719, %v1715
      %v1721 = vlaneseq
      %v1722 = vshrl.u32 %v1721, 7
      %v1723 = vsub.s32 %v1637, %v1722
      %v1724 = vrot.slane %v1586, %v1723
      %v1725 = vlaneseq
      %v1726 = vshrl.u32 %v1725, 7
      %v1727 = vsub.s32 %v1642, %v1726
      %v1728 = vrot.slane %v1587, %v1727
      %v1729 = vsel %vm1647, %v1728, %v1724
      %v1730 = vlaneseq
      %v1731 = vshrl.u32 %v1730, 7
      %v1732 = vsub.s32 %v1637, %v1731
      %v1733 = vrot.slane %v1588, %v1732
      %v1734 = vlaneseq
      %v1735 = vshrl.u32 %v1734, 7
      %v1736 = vsub.s32 %v1642, %v1735
      %v1737 = vrot.slane %v1589, %v1736
      %v1738 = vsel %vm1647, %v1737, %v1733
      %v1739 = vlaneseq
      %v1740 = vshrl.u32 %v1739, 7
      %v1741 = vsub.s32 %v1637, %v1740
      %v1742 = vrot.slane %v1590, %v1741
      %v1743 = vlaneseq
      %v1744 = vshrl.u32 %v1743, 7
      %v1745 = vsub.s32 %v1642, %v1744
      %v1746 = vrot.slane %v1591, %v1745
      %v1747 = vsel %vm1647, %v1746, %v1742
      %v1748 = vlaneseq
      %v1749 = vshrl.u32 %v1748, 7
      %v1750 = vsub.s32 %v1637, %v1749
      %v1751 = vrot.slane %v1592, %v1750
      %v1752 = vlaneseq
      %v1753 = vshrl.u32 %v1752, 7
      %v1754 = vsub.s32 %v1642, %v1753
      %v1755 = vrot.slane %v1593, %v1754
      %v1756 = vsel %vm1647, %v1755, %v1751
      %v1757 = vlaneseq
      %v1758 = vshrl.u32 %v1757, 7
      %v1759 = vsub.s32 %v1637, %v1758
      %v1760 = vrot.slane %v1594, %v1759
      %v1761 = vlaneseq
      %v1762 = vshrl.u32 %v1761, 7
      %v1763 = vsub.s32 %v1642, %v1762
      %v1764 = vrot.slane %v1595, %v1763
      %v1765 = vsel %vm1647, %v1764, %v1760
      %v1766 = vlaneseq
      %v1767 = vshrl.u32 %v1766, 7
      %v1768 = vsub.s32 %v1637, %v1767
      %v1769 = vrot.slane %v1596, %v1768
      %v1770 = vlaneseq
      %v1771 = vshrl.u32 %v1770, 7
      %v1772 = vsub.s32 %v1642, %v1771
      %v1773 = vrot.slane %v1597, %v1772
      %v1774 = vsel %vm1647, %v1773, %v1769
      %v1775 = vlaneseq
      %v1776 = vshrl.u32 %v1775, 7
      %v1777 = vsub.s32 %v1637, %v1776
      %v1778 = vrot.slane %v1598, %v1777
      %v1779 = vlaneseq
      %v1780 = vshrl.u32 %v1779, 7
      %v1781 = vsub.s32 %v1642, %v1780
      %v1782 = vrot.slane %v1599, %v1781
      %v1783 = vsel %vm1647, %v1782, %v1778
      %vm1784 = vcmask 1041409
      %v1785 = vsel %vm1784, %v1657, %v1648
      %vm1786 = vcmask 1042434
      %v1787 = vsel %vm1786, %v1666, %v1785
      %vm1788 = vcmask 1043459
      %v1789 = vsel %vm1788, %v1675, %v1787
      %vm1790 = vcmask 1044484
      %v1791 = vsel %vm1790, %v1684, %v1789
      %vm1792 = vcmask 1045509
      %v1793 = vsel %vm1792, %v1693, %v1791
      %vm1794 = vcmask 1046534
      %v1795 = vsel %vm1794, %v1702, %v1793
      %vm1796 = vcmask 1047559
      %v1797 = vsel %vm1796, %v1711, %v1795
      %v1798 = vsel %vm1784, %v1729, %v1720
      %v1799 = vsel %vm1786, %v1738, %v1798
      %v1800 = vsel %vm1788, %v1747, %v1799
      %v1801 = vsel %vm1790, %v1756, %v1800
      %v1802 = vsel %vm1792, %v1765, %v1801
      %v1803 = vsel %vm1794, %v1774, %v1802
      %v1804 = vsel %vm1796, %v1783, %v1803
      %v1807 = vsel %vm1602, -inf, %v1797
      %v1808 = vsel %vm1603, -inf, %v1804
      %v1809 = vmul.f32 %v1807, 2.0
      %v1810 = vmul.f32 %v1808, 2.0
      %v1811 = vsel %vm1461, %v1809, -inf
      %1812 = vmax.xlane.f32.xlu0 %v1811
      %v1813 = vpop.xlane.xlu0 %1812
      %v1814 = vsel %vm1461, %v1810, -inf
      %1815 = vmax.xlane.f32.xlu0 %v1814
      %v1816 = vpop.xlane.xlu0 %1815
      %v1817 = vsub.f32 %v1809, %v1813
      %v1818 = vsub.f32 %v1810, %v1816
      %v1819 = vmul.f32 %v1817, 1.442695
      %v1820 = vpow.pop %v1819
      %v1821 = vmul.f32 %v1818, 1.442695
      %v1822 = vpow.pop %v1821
      %v1823 = vsel %vm1461, %v1820, 0.0
      %1824 = vadd.xlane.f32.xlu0 %v1823
      %v1825 = vpop.xlane.xlu0 %1824
      %v1826 = vsel %vm1461, %v1822, 0.0
      %1827 = vadd.xlane.f32.xlu0 %v1826
      %v1828 = vpop.xlane.xlu0 %1827
      %v1829 = vrcp.pop %v1825
      %v1830 = vmul.f32 %v1820, %v1829
      %v1831 = vrcp.pop %v1828
      %v1832 = vmul.f32 %v1822, %v1831
      %1833 = vst.msk [vmem:[%s443] sm:$0xff] %vm1461, %v1830
      %1834 = vst.msk [vmem:[%s443 + $0x8] sm:$0xff] %vm1461, %v1832
      %v1835 = vlaneseq
      %v1836 = vshrl.u32 %v1835, 7
      %v1837 = vsub.s32 0, %v1836
      %v1838 = vrot.slane %v1830, %v1837
      %1840 = vbcast.lane.b32.xlu0 %v1838, 256
      %v1841 = vpop.permute.xlu0 %1840
      %s1843 = sor.u32 256, 8
      %1844 = vbcast.lane.b32.xlu0 %v1838, %s1843
      %v1845 = vpop.permute.xlu0 %1844
      %v1846 = vlaneseq
      %v1847 = vshrl.u32 %v1846, 7
      %v1848 = vsub.s32 1, %v1847
      %v1849 = vrot.slane %v1830, %v1848
      %1851 = vbcast.lane.b32.xlu0 %v1849, 256
      %v1852 = vpop.permute.xlu0 %1851
      %s1854 = sor.u32 256, 8
      %1855 = vbcast.lane.b32.xlu0 %v1849, %s1854
      %v1856 = vpop.permute.xlu0 %1855
      %v1857 = vlaneseq
      %v1858 = vshrl.u32 %v1857, 7
      %v1859 = vsub.s32 2, %v1858
      %v1860 = vrot.slane %v1830, %v1859
      %1862 = vbcast.lane.b32.xlu0 %v1860, 256
      %v1863 = vpop.permute.xlu0 %1862
      %s1865 = sor.u32 256, 8
      %1866 = vbcast.lane.b32.xlu0 %v1860, %s1865
      %v1867 = vpop.permute.xlu0 %1866
      %v1868 = vlaneseq
      %v1869 = vshrl.u32 %v1868, 7
      %v1870 = vsub.s32 3, %v1869
      %v1871 = vrot.slane %v1830, %v1870
      %1873 = vbcast.lane.b32.xlu0 %v1871, 256
      %v1874 = vpop.permute.xlu0 %1873
      %s1876 = sor.u32 256, 8
      %1877 = vbcast.lane.b32.xlu0 %v1871, %s1876
      %v1878 = vpop.permute.xlu0 %1877
      %v1879 = vlaneseq
      %v1880 = vshrl.u32 %v1879, 7
      %v1881 = vsub.s32 4, %v1880
      %v1882 = vrot.slane %v1830, %v1881
      %1884 = vbcast.lane.b32.xlu0 %v1882, 256
      %v1885 = vpop.permute.xlu0 %1884
      %s1887 = sor.u32 256, 8
      %1888 = vbcast.lane.b32.xlu0 %v1882, %s1887
      %v1889 = vpop.permute.xlu0 %1888
      %v1890 = vlaneseq
      %v1891 = vshrl.u32 %v1890, 7
      %v1892 = vsub.s32 5, %v1891
      %v1893 = vrot.slane %v1830, %v1892
      %1895 = vbcast.lane.b32.xlu0 %v1893, 256
      %v1896 = vpop.permute.xlu0 %1895
      %s1898 = sor.u32 256, 8
      %1899 = vbcast.lane.b32.xlu0 %v1893, %s1898
      %v1900 = vpop.permute.xlu0 %1899
      %v1901 = vlaneseq
      %v1902 = vshrl.u32 %v1901, 7
      %v1903 = vsub.s32 6, %v1902
      %v1904 = vrot.slane %v1830, %v1903
      %1906 = vbcast.lane.b32.xlu0 %v1904, 256
      %v1907 = vpop.permute.xlu0 %1906
      %s1909 = sor.u32 256, 8
      %1910 = vbcast.lane.b32.xlu0 %v1904, %s1909
      %v1911 = vpop.permute.xlu0 %1910
      %v1912 = vlaneseq
      %v1913 = vshrl.u32 %v1912, 7
      %v1914 = vsub.s32 7, %v1913
      %v1915 = vrot.slane %v1830, %v1914
      %1917 = vbcast.lane.b32.xlu0 %v1915, 256
      %v1918 = vpop.permute.xlu0 %1917
      %s1920 = sor.u32 256, 8
      %1921 = vbcast.lane.b32.xlu0 %v1915, %s1920
      %v1922 = vpop.permute.xlu0 %1921
      %v1923 = vlaneseq
      %v1924 = vshrl.u32 %v1923, 7
      %v1925 = vsub.s32 0, %v1924
      %v1926 = vrot.slane %v1832, %v1925
      %1928 = vbcast.lane.b32.xlu0 %v1926, 256
      %v1929 = vpop.permute.xlu0 %1928
      %s1931 = sor.u32 256, 8
      %1932 = vbcast.lane.b32.xlu0 %v1926, %s1931
      %v1933 = vpop.permute.xlu0 %1932
      %v1934 = vlaneseq
      %v1935 = vshrl.u32 %v1934, 7
      %v1936 = vsub.s32 1, %v1935
      %v1937 = vrot.slane %v1832, %v1936
      %1939 = vbcast.lane.b32.xlu0 %v1937, 256
      %v1940 = vpop.permute.xlu0 %1939
      %s1942 = sor.u32 256, 8
      %1943 = vbcast.lane.b32.xlu0 %v1937, %s1942
      %v1944 = vpop.permute.xlu0 %1943
      %v1945 = vlaneseq
      %v1946 = vshrl.u32 %v1945, 7
      %v1947 = vsub.s32 2, %v1946
      %v1948 = vrot.slane %v1832, %v1947
      %1950 = vbcast.lane.b32.xlu0 %v1948, 256
      %v1951 = vpop.permute.xlu0 %1950
      %s1953 = sor.u32 256, 8
      %1954 = vbcast.lane.b32.xlu0 %v1948, %s1953
      %v1955 = vpop.permute.xlu0 %1954
      %v1956 = vlaneseq
      %v1957 = vshrl.u32 %v1956, 7
      %v1958 = vsub.s32 3, %v1957
      %v1959 = vrot.slane %v1832, %v1958
      %1961 = vbcast.lane.b32.xlu0 %v1959, 256
      %v1962 = vpop.permute.xlu0 %1961
      %s1964 = sor.u32 256, 8
      %1965 = vbcast.lane.b32.xlu0 %v1959, %s1964
      %v1966 = vpop.permute.xlu0 %1965
      %v1967 = vlaneseq
      %v1968 = vshrl.u32 %v1967, 7
      %v1969 = vsub.s32 4, %v1968
      %v1970 = vrot.slane %v1832, %v1969
      %1972 = vbcast.lane.b32.xlu0 %v1970, 256
      %v1973 = vpop.permute.xlu0 %1972
      %s1975 = sor.u32 256, 8
      %1976 = vbcast.lane.b32.xlu0 %v1970, %s1975
      %v1977 = vpop.permute.xlu0 %1976
      %v1978 = vlaneseq
      %v1979 = vshrl.u32 %v1978, 7
      %v1980 = vsub.s32 5, %v1979
      %v1981 = vrot.slane %v1832, %v1980
      %1983 = vbcast.lane.b32.xlu0 %v1981, 256
      %v1984 = vpop.permute.xlu0 %1983
      %s1986 = sor.u32 256, 8
      %1987 = vbcast.lane.b32.xlu0 %v1981, %s1986
      %v1988 = vpop.permute.xlu0 %1987
      %v1989 = vlaneseq
      %v1990 = vshrl.u32 %v1989, 7
      %v1991 = vsub.s32 6, %v1990
      %v1992 = vrot.slane %v1832, %v1991
      %1994 = vbcast.lane.b32.xlu0 %v1992, 256
      %v1995 = vpop.permute.xlu0 %1994
      %s1997 = sor.u32 256, 8
      %1998 = vbcast.lane.b32.xlu0 %v1992, %s1997
      %v1999 = vpop.permute.xlu0 %1998
      %v2000 = vlaneseq
      %v2001 = vshrl.u32 %v2000, 7
      %v2002 = vsub.s32 7, %v2001
      %v2003 = vrot.slane %v1832, %v2002
      %2005 = vbcast.lane.b32.xlu0 %v2003, 256
      %v2006 = vpop.permute.xlu0 %2005
      %s2008 = sor.u32 256, 8
      %2009 = vbcast.lane.b32.xlu0 %v2003, %s2008
      %v2010 = vpop.permute.xlu0 %2009
      %v2011 = vmul.f32 %v1841, %v446
      %v2012 = vmul.f32 %v1845, %v447
      %v2013 = vmul.f32 %v1852, %v448
      %v2014 = vmul.f32 %v1856, %v449
      %v2015 = vmul.f32 %v1863, %v450
      %v2016 = vmul.f32 %v1867, %v451
      %v2017 = vmul.f32 %v1874, %v452
      %v2018 = vmul.f32 %v1878, %v453
      %v2019 = vmul.f32 %v1885, %v454
      %v2020 = vmul.f32 %v1889, %v455
      %v2021 = vmul.f32 %v1896, %v456
      %v2022 = vmul.f32 %v1900, %v457
      %v2023 = vmul.f32 %v1907, %v458
      %v2024 = vmul.f32 %v1911, %v459
      %v2025 = vmul.f32 %v1918, %v460
      %v2026 = vmul.f32 %v1922, %v461
      %v2027 = vmul.f32 %v1929, %v462
      %v2028 = vmul.f32 %v1933, %v463
      %v2029 = vmul.f32 %v1940, %v464
      %v2030 = vmul.f32 %v1944, %v465
      %v2031 = vmul.f32 %v1951, %v466
      %v2032 = vmul.f32 %v1955, %v467
      %v2033 = vmul.f32 %v1962, %v468
      %v2034 = vmul.f32 %v1966, %v469
      %v2035 = vmul.f32 %v1973, %v470
      %v2036 = vmul.f32 %v1977, %v471
      %v2037 = vmul.f32 %v1984, %v472
      %v2038 = vmul.f32 %v1988, %v473
      %v2039 = vmul.f32 %v1995, %v474
      %v2040 = vmul.f32 %v1999, %v475
      %v2041 = vmul.f32 %v2006, %v476
      %v2042 = vmul.f32 %v2010, %v477
      %v2043 = vsel %vm815, %v2011, 0.0
      %v2044 = vsel %vm815, %v2012, 0.0
      %v2045 = vadd.f32 %v2043, %v2044
      %v2046 = vrot.slane %v2045, 4
      %v2047 = vadd.f32 %v2045, %v2046
      %v2048 = vrot.slane %v2047, 2
      %v2049 = vadd.f32 %v2047, %v2048
      %v2050 = vrot.slane %v2049, 1
      %v2051 = vadd.f32 %v2049, %v2050
      %v2052 = vsel %vm815, %v2013, 0.0
      %v2053 = vsel %vm815, %v2014, 0.0
      %v2054 = vadd.f32 %v2052, %v2053
      %v2055 = vrot.slane %v2054, 4
      %v2056 = vadd.f32 %v2054, %v2055
      %v2057 = vrot.slane %v2056, 2
      %v2058 = vadd.f32 %v2056, %v2057
      %v2059 = vrot.slane %v2058, 1
      %v2060 = vadd.f32 %v2058, %v2059
      %v2061 = vsel %vm815, %v2015, 0.0
      %v2062 = vsel %vm815, %v2016, 0.0
      %v2063 = vadd.f32 %v2061, %v2062
      %v2064 = vrot.slane %v2063, 4
      %v2065 = vadd.f32 %v2063, %v2064
      %v2066 = vrot.slane %v2065, 2
      %v2067 = vadd.f32 %v2065, %v2066
      %v2068 = vrot.slane %v2067, 1
      %v2069 = vadd.f32 %v2067, %v2068
      %v2070 = vsel %vm815, %v2017, 0.0
      %v2071 = vsel %vm815, %v2018, 0.0
      %v2072 = vadd.f32 %v2070, %v2071
      %v2073 = vrot.slane %v2072, 4
      %v2074 = vadd.f32 %v2072, %v2073
      %v2075 = vrot.slane %v2074, 2
      %v2076 = vadd.f32 %v2074, %v2075
      %v2077 = vrot.slane %v2076, 1
      %v2078 = vadd.f32 %v2076, %v2077
      %v2079 = vsel %vm815, %v2019, 0.0
      %v2080 = vsel %vm815, %v2020, 0.0
      %v2081 = vadd.f32 %v2079, %v2080
      %v2082 = vrot.slane %v2081, 4
      %v2083 = vadd.f32 %v2081, %v2082
      %v2084 = vrot.slane %v2083, 2
      %v2085 = vadd.f32 %v2083, %v2084
      %v2086 = vrot.slane %v2085, 1
      %v2087 = vadd.f32 %v2085, %v2086
      %v2088 = vsel %vm815, %v2021, 0.0
      %v2089 = vsel %vm815, %v2022, 0.0
      %v2090 = vadd.f32 %v2088, %v2089
      %v2091 = vrot.slane %v2090, 4
      %v2092 = vadd.f32 %v2090, %v2091
      %v2093 = vrot.slane %v2092, 2
      %v2094 = vadd.f32 %v2092, %v2093
      %v2095 = vrot.slane %v2094, 1
      %v2096 = vadd.f32 %v2094, %v2095
      %v2097 = vsel %vm815, %v2023, 0.0
      %v2098 = vsel %vm815, %v2024, 0.0
      %v2099 = vadd.f32 %v2097, %v2098
      %v2100 = vrot.slane %v2099, 4
      %v2101 = vadd.f32 %v2099, %v2100
      %v2102 = vrot.slane %v2101, 2
      %v2103 = vadd.f32 %v2101, %v2102
      %v2104 = vrot.slane %v2103, 1
      %v2105 = vadd.f32 %v2103, %v2104
      %v2106 = vsel %vm815, %v2025, 0.0
      %v2107 = vsel %vm815, %v2026, 0.0
      %v2108 = vadd.f32 %v2106, %v2107
      %v2109 = vrot.slane %v2108, 4
      %v2110 = vadd.f32 %v2108, %v2109
      %v2111 = vrot.slane %v2110, 2
      %v2112 = vadd.f32 %v2110, %v2111
      %v2113 = vrot.slane %v2112, 1
      %v2114 = vadd.f32 %v2112, %v2113
      %v2115 = vsel %vm815, %v2027, 0.0
      %v2116 = vsel %vm815, %v2028, 0.0
      %v2117 = vadd.f32 %v2115, %v2116
      %v2118 = vrot.slane %v2117, 4
      %v2119 = vadd.f32 %v2117, %v2118
      %v2120 = vrot.slane %v2119, 2
      %v2121 = vadd.f32 %v2119, %v2120
      %v2122 = vrot.slane %v2121, 1
      %v2123 = vadd.f32 %v2121, %v2122
      %v2124 = vsel %vm815, %v2029, 0.0
      %v2125 = vsel %vm815, %v2030, 0.0
      %v2126 = vadd.f32 %v2124, %v2125
      %v2127 = vrot.slane %v2126, 4
      %v2128 = vadd.f32 %v2126, %v2127
      %v2129 = vrot.slane %v2128, 2
      %v2130 = vadd.f32 %v2128, %v2129
      %v2131 = vrot.slane %v2130, 1
      %v2132 = vadd.f32 %v2130, %v2131
      %v2133 = vsel %vm815, %v2031, 0.0
      %v2134 = vsel %vm815, %v2032, 0.0
      %v2135 = vadd.f32 %v2133, %v2134
      %v2136 = vrot.slane %v2135, 4
      %v2137 = vadd.f32 %v2135, %v2136
      %v2138 = vrot.slane %v2137, 2
      %v2139 = vadd.f32 %v2137, %v2138
      %v2140 = vrot.slane %v2139, 1
      %v2141 = vadd.f32 %v2139, %v2140
      %v2142 = vsel %vm815, %v2033, 0.0
      %v2143 = vsel %vm815, %v2034, 0.0
      %v2144 = vadd.f32 %v2142, %v2143
      %v2145 = vrot.slane %v2144, 4
      %v2146 = vadd.f32 %v2144, %v2145
      %v2147 = vrot.slane %v2146, 2
      %v2148 = vadd.f32 %v2146, %v2147
      %v2149 = vrot.slane %v2148, 1
      %v2150 = vadd.f32 %v2148, %v2149
      %v2151 = vsel %vm815, %v2035, 0.0
      %v2152 = vsel %vm815, %v2036, 0.0
      %v2153 = vadd.f32 %v2151, %v2152
      %v2154 = vrot.slane %v2153, 4
      %v2155 = vadd.f32 %v2153, %v2154
      %v2156 = vrot.slane %v2155, 2
      %v2157 = vadd.f32 %v2155, %v2156
      %v2158 = vrot.slane %v2157, 1
      %v2159 = vadd.f32 %v2157, %v2158
      %v2160 = vsel %vm815, %v2037, 0.0
      %v2161 = vsel %vm815, %v2038, 0.0
      %v2162 = vadd.f32 %v2160, %v2161
      %v2163 = vrot.slane %v2162, 4
      %v2164 = vadd.f32 %v2162, %v2163
      %v2165 = vrot.slane %v2164, 2
      %v2166 = vadd.f32 %v2164, %v2165
      %v2167 = vrot.slane %v2166, 1
      %v2168 = vadd.f32 %v2166, %v2167
      %v2169 = vsel %vm815, %v2039, 0.0
      %v2170 = vsel %vm815, %v2040, 0.0
      %v2171 = vadd.f32 %v2169, %v2170
      %v2172 = vrot.slane %v2171, 4
      %v2173 = vadd.f32 %v2171, %v2172
      %v2174 = vrot.slane %v2173, 2
      %v2175 = vadd.f32 %v2173, %v2174
      %v2176 = vrot.slane %v2175, 1
      %v2177 = vadd.f32 %v2175, %v2176
      %v2178 = vsel %vm815, %v2041, 0.0
      %v2179 = vsel %vm815, %v2042, 0.0
      %v2180 = vadd.f32 %v2178, %v2179
      %v2181 = vrot.slane %v2180, 4
      %v2182 = vadd.f32 %v2180, %v2181
      %v2183 = vrot.slane %v2182, 2
      %v2184 = vadd.f32 %v2182, %v2183
      %v2185 = vrot.slane %v2184, 1
      %v2186 = vadd.f32 %v2184, %v2185
      %v2203 = vsel %vm1784, %v2060, %v2051
      %v2204 = vsel %vm1786, %v2069, %v2203
      %v2205 = vsel %vm1788, %v2078, %v2204
      %v2206 = vsel %vm1790, %v2087, %v2205
      %v2207 = vsel %vm1792, %v2096, %v2206
      %v2208 = vsel %vm1794, %v2105, %v2207
      %v2209 = vsel %vm1796, %v2114, %v2208
      %v2210 = vsel %vm1784, %v2132, %v2123
      %v2211 = vsel %vm1786, %v2141, %v2210
      %v2212 = vsel %vm1788, %v2150, %v2211
      %v2213 = vsel %vm1790, %v2159, %v2212
      %v2214 = vsel %vm1792, %v2168, %v2213
      %v2215 = vsel %vm1794, %v2177, %v2214
      %v2216 = vsel %vm1796, %v2186, %v2215
      %2219 = vst.msk [vmem:[%s437] sm:$0xff] %vm815, %v2209
      %2220 = vst.msk [vmem:[%s437 + $0x8] sm:$0xff] %vm815, %v2216
      %s2221 = smul.u32 2, %s24
      %p2222 = scmp.lt.s32.totalorder %s2221, 5
      %s2223 = scalar_select %p2222, %s2221, 5
      %s2224 = smul.addr %s2223, 8
      %s2225 = scalar_lea.vmem %s9, %s2224
      %s2226 = smul.u32 2, %s24
      %p2227 = scmp.lt.s32.totalorder %s2226, 5
      %s2228 = scalar_select %p2227, %s2226, 5
      %s2229 = smul.addr %s2228, 8
      %s2230 = scalar_lea.vmem %s10, %s2229
      // Predicated region
      $region57: #{tpu_custom_call.1} parent=55 // pred_check
        %p2231 = pneg %p251
      $region58: #{tpu_custom_call.1} parent=55 // pred_check_branch
        %2233 = sbr.rel (%p2231) target = $region60
      $region59: #{tpu_custom_call.1} parent=55 // pred_region
        %s2234 = smul.u32 2, %s24
      $region60: #{tpu_custom_call.1} parent=55 // pred_fallthru
        _
      // Predicated region
      $region61: #{tpu_custom_call.1} parent=55 // pred_check
        %p2235 = pneg %p277
      $region62: #{tpu_custom_call.1} parent=55 // pred_check_branch
        %2237 = sbr.rel (%p2235) target = $region64
      $region63: #{tpu_custom_call.1} parent=55 // pred_region
        %s2238 = smul.u32 2, %s24
      $region64: #{tpu_custom_call.1} parent=55 // pred_fallthru
        _
    $region56: #{tpu_custom_call.1} parent=5 // pred_fallthru
      _
    %p2239 = scmp.le.s32.totalorder 2, %s19
    // Predicated region
    $region65: #{tpu_custom_call.1} parent=5 // pred_check
      %p2240 = pneg %p2239
    $region66: #{tpu_custom_call.1} parent=5 // pred_check_branch
      %2242 = sbr.rel (%p2240) target = $region68
    $region67: #{tpu_custom_call.1} parent=5 // pred_region
      %s2243 = ssub.s32 %s19, 2
      // Predicated region
      $region69: #{tpu_custom_call.1} parent=67 // pred_check
        %p2244 = pneg %p257
      $region70: #{tpu_custom_call.1} parent=67 // pred_check_branch
        %2246 = sbr.rel (%p2244) target = $region72
      $region71: #{tpu_custom_call.1} parent=67 // pred_region
        %s2247 = smul.u32 2, %s25
        %p2248 = scmp.lt.s32.totalorder %s2247, 5
        %s2249 = scalar_select %p2248, %s2247, 5
        %s2250 = smul.addr %s2249, 8
        %s2251 = scalar_lea.vmem %s9, %s2250
      $region72: #{tpu_custom_call.1} parent=67 // pred_fallthru
        _
      // Predicated region
      $region73: #{tpu_custom_call.1} parent=67 // pred_check
        %p2252 = pneg %p283
      $region74: #{tpu_custom_call.1} parent=67 // pred_check_branch
        %2254 = sbr.rel (%p2252) target = $region76
      $region75: #{tpu_custom_call.1} parent=67 // pred_region
        %s2255 = smul.u32 2, %s25
        %p2256 = scmp.lt.s32.totalorder %s2255, 5
        %s2257 = scalar_select %p2256, %s2255, 5
        %s2258 = smul.addr %s2257, 8
        %s2259 = scalar_lea.vmem %s10, %s2258
      $region76: #{tpu_custom_call.1} parent=67 // pred_fallthru
        _
    $region68: #{tpu_custom_call.1} parent=5 // pred_fallthru
      _
  $region6: #{tpu_custom_call.1} parent=0 // loop_footer
    %s23 = sadd.s32 1, %s19
  $region7: #{tpu_custom_call.1} parent=0 // loop_footer_branch
    %18 = sbr.rel target = $region3
  $region8: #{tpu_custom_call.1} parent=0 // loop_exit
    _

</llo_original>
